<compile_context>
chip_gen: v7x
topology: tpu7x:2x2x1
jax: 0.10.0
libtpu: 0.0.40
codegen_flags: <defaults>
</compile_context>

<pallas_src>
import functools
import math

import jax
import jax.numpy as jnp
from jax import lax
from jax.experimental import pallas as pl
from jax.experimental.pallas import tpu as pltpu


def _mha_kernel(x_ref,
                wq_ref, bq_ref, wk_ref, bk_ref, wv_ref, bv_ref, wo_ref, bo_ref,
                o_ref,
                k_scr, v_scr, ctx_scr,
                *, n_heads: int, d_k: int, tq: int):
    # x_ref:   (1, S, D) bf16   -- full sequence of x for this batch element
    # w*_ref:  (D, D)    bf16   -- pre-transposed linear weights
    # b*_ref:  (1, D)    f32
    # o_ref:   (1, tq, D) f32
    # k_scr/v_scr: (S, D) bf16 VMEM scratch (per-batch K/V projections)
    # ctx_scr:     (tq, D) f32 VMEM scratch (merged per-head contexts)
    qi = pl.program_id(1)

    # --- K/V projections: compute once per batch element, cache in VMEM ---
    @pl.when(qi == 0)
    def _():
        x_all = x_ref[0]                                              # (S, D) bf16
        k = jnp.dot(x_all, wk_ref[...],
                    preferred_element_type=jnp.float32) + bk_ref[0]   # (S, D) f32
        v = jnp.dot(x_all, wv_ref[...],
                    preferred_element_type=jnp.float32) + bv_ref[0]
        k_scr[...] = k.astype(jnp.bfloat16)
        v_scr[...] = v.astype(jnp.bfloat16)

    # --- Q projection for this query tile (bf16 MXU, f32 accumulate) ---
    q_start = pl.multiple_of(qi * tq, tq)
    xq = x_ref[0, pl.ds(q_start, tq), :]                              # (tq, D) bf16
    q = jnp.dot(xq, wq_ref[...],
                preferred_element_type=jnp.float32) + bq_ref[0]       # (tq, D) f32
    scale = 1.0 / math.sqrt(float(d_k))
    q_bf = (q * scale).astype(jnp.bfloat16)

    # --- per-head attention, no split/merge transposes ---
    for h in range(n_heads):
        lo = h * d_k
        hi = lo + d_k
        qh = q_bf[:, lo:hi]                                           # (tq, d_k) bf16
        kh = k_scr[:, lo:hi]                                          # (S,  d_k) bf16
        vh = v_scr[:, lo:hi]                                          # (S,  d_k) bf16

        # scores = qh @ kh^T without an explicit transpose (contract on d_k).
        s = lax.dot_general(qh, kh, (((1,), (1,)), ((), ())),
                            preferred_element_type=jnp.float32)       # (tq, S) f32

        m = jnp.max(s, axis=-1, keepdims=True)
        e = jnp.exp(s - m)
        denom = jnp.sum(e, axis=-1, keepdims=True)
        p = e * pl.reciprocal(denom, approx=True)                     # (tq, S) f32

        ctx = jnp.dot(p.astype(jnp.bfloat16), vh,
                      preferred_element_type=jnp.float32)             # (tq, d_k) f32
        ctx_scr[:, lo:hi] = ctx

    # --- output projection ---
    out = jnp.dot(ctx_scr[...].astype(jnp.bfloat16), wo_ref[...],
                  preferred_element_type=jnp.float32) + bo_ref[0]     # (tq, D) f32
    o_ref[0] = out.astype(o_ref.dtype)


def multi_head_attention(x, params, *, n_heads: int):
    """x: [B, S, D] float32. params: dict of pre-transposed f32 weights/biases."""
    B, S, D = x.shape
    d_k = D // n_heads

    # Query-tile size: lane/MXU friendly when S allows, otherwise full sequence.
    tq = 128 if S % 128 == 0 else S
    n_q = S // tq

    kernel = functools.partial(_mha_kernel, n_heads=n_heads, d_k=d_k, tq=tq)

    # bf16 operands for the MXU; biases / accumulation / softmax stay f32.
    x_bf = x.astype(jnp.bfloat16)
    wq = params["wq"].astype(jnp.bfloat16)
    wk = params["wk"].astype(jnp.bfloat16)
    wv = params["wv"].astype(jnp.bfloat16)
    wo = params["wo"].astype(jnp.bfloat16)

    w_spec = pl.BlockSpec((D, D), lambda b, qi: (0, 0))
    b_spec = pl.BlockSpec((1, D), lambda b, qi: (0, 0))
    # Full-sequence x block: block index is constant in qi, so it is only
    # DMA'd when the batch index changes.
    x_spec = pl.BlockSpec((1, S, D), lambda b, qi: (b, 0, 0))
    out_spec = pl.BlockSpec((1, tq, D), lambda b, qi: (b, qi, 0))

    # Advisory cost estimate (per whole call).
    flops = B * (8 * S * D * D + 4 * S * S * D)
    transcendentals = B * n_heads * S * S
    bytes_accessed = (B * S * D * 2          # x, bf16, streamed once per batch elem
                      + 4 * D * D * 2        # weights, bf16
                      + 4 * D * 4            # biases, f32
                      + B * S * D * 4)       # output, f32

    return pl.pallas_call(
        kernel,
        out_shape=jax.ShapeDtypeStruct((B, S, D), jnp.float32),
        grid_spec=pltpu.PrefetchScalarGridSpec(
            num_scalar_prefetch=0,
            grid=(B, n_q),
            in_specs=[x_spec,
                      w_spec, b_spec,   # W_q, b_q
                      w_spec, b_spec,   # W_k, b_k
                      w_spec, b_spec,   # W_v, b_v
                      w_spec, b_spec],  # W_o, b_o
            out_specs=out_spec,
            scratch_shapes=[
                pltpu.VMEM((S, D), jnp.bfloat16),   # K cache (current batch)
                pltpu.VMEM((S, D), jnp.bfloat16),   # V cache (current batch)
                pltpu.VMEM((tq, D), jnp.float32),   # merged head contexts
            ]),
        compiler_params=pltpu.CompilerParams(
            dimension_semantics=("parallel", "arbitrary"),
            vmem_limit_bytes=64 * 1024 * 1024),
        cost_estimate=pl.CostEstimate(flops=flops,
                                      transcendentals=transcendentals,
                                      bytes_accessed=bytes_accessed),
    )(x_bf,
      wq, params["bq"],
      wk, params["bk"],
      wv, params["bv"],
      wo, params["bo"])


def _init_linear(key, d_in, d_out):
    # Mimic nn.Linear default init: U(-1/sqrt(fan_in), 1/sqrt(fan_in)).
    kw, kb = jax.random.split(key)
    bound = 1.0 / math.sqrt(d_in)
    # Stored already transposed: (d_in, d_out) so y = x @ W + b.
    w = jax.random.uniform(kw, (d_in, d_out), jnp.float32, -bound, bound)
    b = jax.random.uniform(kb, (1, d_out), jnp.float32, -bound, bound)
    return w, b


def _reference(x, params, n_heads):
    B, S, D = x.shape
    d_k = D // n_heads
    q = x @ params["wq"] + params["bq"][0]
    k = x @ params["wk"] + params["bk"][0]
    v = x @ params["wv"] + params["bv"][0]
    qh = q.reshape(B, S, n_heads, d_k).transpose(0, 2, 1, 3)
    kh = k.reshape(B, S, n_heads, d_k).transpose(0, 2, 1, 3)
    vh = v.reshape(B, S, n_heads, d_k).transpose(0, 2, 1, 3)
    scores = jnp.einsum('bhqd,bhkd->bhqk', qh, kh) / math.sqrt(d_k)
    attn = jax.nn.softmax(scores, axis=-1)
    ctx = jnp.einsum('bhqk,bhkd->bhqd', attn, vh)
    merged = ctx.transpose(0, 2, 1, 3).reshape(B, S, D)
    return merged @ params["wo"] + params["bo"][0]


if __name__ == "__main__":
    # Toy shapes (below the 128-lane architecture floor, but block shapes equal
    # the full array dims so the (8,128) constraint is satisfied).
    B, S, D, H = 2, 8, 32, 4  # batch, seq, d_model, n_heads

    key = jax.random.PRNGKey(0)
    kx, kq, kk, kv, ko = jax.random.split(key, 5)

    x = jax.random.normal(kx, (B, S, D), jnp.float32)

    wq, bq = _init_linear(kq, D, D)
    wk, bk = _init_linear(kk, D, D)
    wv, bv = _init_linear(kv, D, D)
    wo, bo = _init_linear(ko, D, D)
    params = dict(wq=wq, bq=bq, wk=wk, bk=bk, wv=wv, bv=bv, wo=wo, bo=bo)

    out = multi_head_attention(x, params, n_heads=H)
    out = jax.block_until_ready(out)

    ref = _reference(x, params, H)
    assert out.shape == (B, S, D)
    # bf16 MXU operands (f32 accumulate / f32 softmax) -> ~1e-2 level deviation
    # vs the pure-f32 reference is expected.
    assert jnp.allclose(out, ref, atol=5e-2, rtol=5e-2), "mismatch vs JAX reference"

    print("KERNEL_OK")
</pallas_src>

<mosaic_0001>
module attributes {stable_mosaic.version = 11 : i64} {
  func.func @_mha_kernel(%arg0: i32, %arg1: i32, %arg2: memref<1x8x32xbf16, #tpu.memory_space<vmem>>, %arg3: memref<32x32xbf16, #tpu.memory_space<vmem>>, %arg4: memref<1x32xf32, #tpu.memory_space<vmem>>, %arg5: memref<32x32xbf16, #tpu.memory_space<vmem>>, %arg6: memref<1x32xf32, #tpu.memory_space<vmem>>, %arg7: memref<32x32xbf16, #tpu.memory_space<vmem>>, %arg8: memref<1x32xf32, #tpu.memory_space<vmem>>, %arg9: memref<32x32xbf16, #tpu.memory_space<vmem>>, %arg10: memref<1x32xf32, #tpu.memory_space<vmem>>, %arg11: memref<1x8x32xf32, #tpu.memory_space<vmem>>, %arg12: memref<8x32xbf16, #tpu.memory_space<vmem>>, %arg13: memref<8x32xbf16, #tpu.memory_space<vmem>>, %arg14: memref<8x32xf32, #tpu.memory_space<vmem>>) attributes {dimension_semantics = [#tpu.dimension_semantics<parallel>, #tpu.dimension_semantics<arbitrary>], iteration_bounds = array<i64: 2, 1>, scalar_prefetch = 0 : i64, scratch_operands = 3 : i64, tpu.core_type = #tpu.core_type<tc>, window_params = [{transform_indices = @transform_0, window_bounds = array<i64: 1, 8, 32>}, {pipeline_mode = #tpu.pipeline_mode<synchronous>, transform_indices = @transform_1, window_bounds = array<i64: 32, 32>}, {pipeline_mode = #tpu.pipeline_mode<synchronous>, transform_indices = @transform_2, window_bounds = array<i64: 1, 32>}, {pipeline_mode = #tpu.pipeline_mode<synchronous>, transform_indices = @transform_3, window_bounds = array<i64: 32, 32>}, {pipeline_mode = #tpu.pipeline_mode<synchronous>, transform_indices = @transform_4, window_bounds = array<i64: 1, 32>}, {pipeline_mode = #tpu.pipeline_mode<synchronous>, transform_indices = @transform_5, window_bounds = array<i64: 32, 32>}, {pipeline_mode = #tpu.pipeline_mode<synchronous>, transform_indices = @transform_6, window_bounds = array<i64: 1, 32>}, {pipeline_mode = #tpu.pipeline_mode<synchronous>, transform_indices = @transform_7, window_bounds = array<i64: 32, 32>}, {pipeline_mode = #tpu.pipeline_mode<synchronous>, transform_indices = @transform_8, window_bounds = array<i64: 1, 32>}, {transform_indices = @transform_9, window_bounds = array<i64: 1, 8, 32>}]} {
    %c0_i32 = arith.constant 0 : i32
    %0 = arith.cmpi eq, %arg1, %c0_i32 : i32
    %1 = arith.extui %0 : i1 to i32
    %c0_i32_0 = arith.constant 0 : i32
    %2 = arith.cmpi ne, %1, %c0_i32_0 : i32
    scf.if %2 {
      %c0_54 = arith.constant 0 : index
      %c0_55 = arith.constant 0 : index
      %c0_56 = arith.constant 0 : index
      %98 = vector.load %arg2[%c0_54, %c0_55, %c0_56] : memref<1x8x32xbf16, #tpu.memory_space<vmem>>, vector<1x8x32xbf16>
      %99 = vector.shape_cast %98 : vector<1x8x32xbf16> to vector<8x32xbf16>
      %c0_57 = arith.constant 0 : index
      %c0_58 = arith.constant 0 : index
      %100 = vector.load %arg5[%c0_57, %c0_58] : memref<32x32xbf16, #tpu.memory_space<vmem>>, vector<32x32xbf16>
      %cst_59 = arith.constant dense<0.000000e+00> : vector<8x32xf32>
      %101 = tpu.matmul %99, %100, %cst_59 {dimension_numbers = #tpu.dot_dimension_numbers<[1], [0], [0], [1], [0, 0, 1, 1], [], []>} : vector<8x32xbf16>, vector<32x32xbf16>, vector<8x32xf32> -> vector<8x32xf32>
      %c0_60 = arith.constant 0 : index
      %c0_61 = arith.constant 0 : index
      %102 = vector.load %arg6[%c0_60, %c0_61] : memref<1x32xf32, #tpu.memory_space<vmem>>, vector<1x32xf32>
      %103 = vector.shape_cast %102 : vector<1x32xf32> to vector<32xf32>
      %104 = vector.shape_cast %103 : vector<32xf32> to vector<1x32xf32>
      %105 = vector.broadcast %104 : vector<1x32xf32> to vector<8x32xf32>
      %106 = arith.addf %101, %105 : vector<8x32xf32>
      %c0_62 = arith.constant 0 : index
      %c0_63 = arith.constant 0 : index
      %107 = vector.load %arg7[%c0_62, %c0_63] : memref<32x32xbf16, #tpu.memory_space<vmem>>, vector<32x32xbf16>
      %cst_64 = arith.constant dense<0.000000e+00> : vector<8x32xf32>
      %108 = tpu.matmul %99, %107, %cst_64 {dimension_numbers = #tpu.dot_dimension_numbers<[1], [0], [0], [1], [0, 0, 1, 1], [], []>} : vector<8x32xbf16>, vector<32x32xbf16>, vector<8x32xf32> -> vector<8x32xf32>
      %c0_65 = arith.constant 0 : index
      %c0_66 = arith.constant 0 : index
      %109 = vector.load %arg8[%c0_65, %c0_66] : memref<1x32xf32, #tpu.memory_space<vmem>>, vector<1x32xf32>
      %110 = vector.shape_cast %109 : vector<1x32xf32> to vector<32xf32>
      %111 = vector.shape_cast %110 : vector<32xf32> to vector<1x32xf32>
      %112 = vector.broadcast %111 : vector<1x32xf32> to vector<8x32xf32>
      %113 = arith.addf %108, %112 : vector<8x32xf32>
      %114 = arith.truncf %106 : vector<8x32xf32> to vector<8x32xbf16>
      %c0_67 = arith.constant 0 : index
      %c0_68 = arith.constant 0 : index
      %115 = vector.load %arg12[%c0_67, %c0_68] : memref<8x32xbf16, #tpu.memory_space<vmem>>, vector<8x32xbf16>
      tpu.vector_store %arg12[%c0_67, %c0_68], %114 {strides = array<i32>} : memref<8x32xbf16, #tpu.memory_space<vmem>>, vector<8x32xbf16>,
      %116 = arith.truncf %113 : vector<8x32xf32> to vector<8x32xbf16>
      %c0_69 = arith.constant 0 : index
      %c0_70 = arith.constant 0 : index
      %117 = vector.load %arg13[%c0_69, %c0_70] : memref<8x32xbf16, #tpu.memory_space<vmem>>, vector<8x32xbf16>
      tpu.vector_store %arg13[%c0_69, %c0_70], %116 {strides = array<i32>} : memref<8x32xbf16, #tpu.memory_space<vmem>>, vector<8x32xbf16>,
    } else {
    }
    %c8_i32 = arith.constant 8 : i32
    %3 = arith.muli %arg1, %c8_i32 : i32
    %4 = tpu.assume_multiple %3, 8 : i32
    %c0 = arith.constant 0 : index
    %5 = arith.index_cast %4 : i32 to index
    %c0_1 = arith.constant 0 : index
    %6 = vector.load %arg2[%c0, %5, %c0_1] : memref<1x8x32xbf16, #tpu.memory_space<vmem>>, vector<1x8x32xbf16>
    %7 = vector.shape_cast %6 : vector<1x8x32xbf16> to vector<8x32xbf16>
    %c0_2 = arith.constant 0 : index
    %c0_3 = arith.constant 0 : index
    %8 = vector.load %arg3[%c0_2, %c0_3] : memref<32x32xbf16, #tpu.memory_space<vmem>>, vector<32x32xbf16>
    %cst = arith.constant dense<0.000000e+00> : vector<8x32xf32>
    %9 = tpu.matmul %7, %8, %cst {dimension_numbers = #tpu.dot_dimension_numbers<[1], [0], [0], [1], [0, 0, 1, 1], [], []>} : vector<8x32xbf16>, vector<32x32xbf16>, vector<8x32xf32> -> vector<8x32xf32>
    %c0_4 = arith.constant 0 : index
    %c0_5 = arith.constant 0 : index
    %10 = vector.load %arg4[%c0_4, %c0_5] : memref<1x32xf32, #tpu.memory_space<vmem>>, vector<1x32xf32>
    %11 = vector.shape_cast %10 : vector<1x32xf32> to vector<32xf32>
    %12 = vector.shape_cast %11 : vector<32xf32> to vector<1x32xf32>
    %13 = vector.broadcast %12 : vector<1x32xf32> to vector<8x32xf32>
    %14 = arith.addf %9, %13 : vector<8x32xf32>
    %cst_6 = arith.constant 0.353553385 : f32
    %15 = vector.broadcast %cst_6 : f32 to vector<8x32xf32>
    %16 = arith.mulf %14, %15 : vector<8x32xf32>
    %17 = arith.truncf %16 : vector<8x32xf32> to vector<8x32xbf16>
    %18 = vector.extract_strided_slice %17 {offsets = [0, 0], sizes = [8, 8], strides = [1, 1]} : vector<8x32xbf16> to vector<8x8xbf16>
    %c0_7 = arith.constant 0 : index
    %c0_8 = arith.constant 0 : index
    %19 = vector.load %arg12[%c0_7, %c0_8] : memref<8x32xbf16, #tpu.memory_space<vmem>>, vector<8x8xbf16>
    %c0_9 = arith.constant 0 : index
    %c0_10 = arith.constant 0 : index
    %20 = vector.load %arg13[%c0_9, %c0_10] : memref<8x32xbf16, #tpu.memory_space<vmem>>, vector<8x8xbf16>
    %cst_11 = arith.constant dense<0.000000e+00> : vector<8x8xf32>
    %21 = tpu.matmul %18, %19, %cst_11 {dimension_numbers = #tpu.dot_dimension_numbers<[1], [1], [0], [0], [0, 0, 1, 0], [], []>} : vector<8x8xbf16>, vector<8x8xbf16>, vector<8x8xf32> -> vector<8x8xf32>
    %cst_12 = arith.constant dense<0xFF800000> : vector<8xf32>
    %22 = vector.multi_reduction <maximumf>, %21, %cst_12 [1] : vector<8x8xf32> to vector<8xf32>
    %23 = vector.shape_cast %22 : vector<8xf32> to vector<8x1xf32>
    %24 = vector.broadcast %23 : vector<8x1xf32> to vector<8x8xf32>
    %25 = arith.subf %21, %24 : vector<8x8xf32>
    %26 = math.exp %25 : vector<8x8xf32>
    %cst_13 = arith.constant dense<0.000000e+00> : vector<8xf32>
    %27 = vector.multi_reduction <add>, %26, %cst_13 [1] : vector<8x8xf32> to vector<8xf32>
    %28 = vector.shape_cast %27 : vector<8xf32> to vector<8x1xf32>
    %29 = tpu.reciprocal %28 {approx = true} : vector<8x1xf32> -> vector<8x1xf32>
    %30 = vector.broadcast %29 : vector<8x1xf32> to vector<8x8xf32>
    %31 = arith.mulf %26, %30 : vector<8x8xf32>
    %32 = arith.truncf %31 : vector<8x8xf32> to vector<8x8xbf16>
    %cst_14 = arith.constant dense<0.000000e+00> : vector<8x8xf32>
    %33 = tpu.matmul %32, %20, %cst_14 {dimension_numbers = #tpu.dot_dimension_numbers<[1], [0], [0], [1], [0, 0, 1, 1], [], []>} : vector<8x8xbf16>, vector<8x8xbf16>, vector<8x8xf32> -> vector<8x8xf32>
    %c0_15 = arith.constant 0 : index
    %c0_16 = arith.constant 0 : index
    %34 = vector.load %arg14[%c0_15, %c0_16] : memref<8x32xf32, #tpu.memory_space<vmem>>, vector<8x8xf32>
    tpu.vector_store %arg14[%c0_15, %c0_16], %33 {strides = array<i32>} : memref<8x32xf32, #tpu.memory_space<vmem>>, vector<8x8xf32>,
    %35 = vector.extract_strided_slice %17 {offsets = [0, 8], sizes = [8, 8], strides = [1, 1]} : vector<8x32xbf16> to vector<8x8xbf16>
    %c0_17 = arith.constant 0 : index
    %c8 = arith.constant 8 : index
    %36 = vector.load %arg12[%c0_17, %c8] : memref<8x32xbf16, #tpu.memory_space<vmem>>, vector<8x8xbf16>
    %c0_18 = arith.constant 0 : index
    %c8_19 = arith.constant 8 : index
    %37 = vector.load %arg13[%c0_18, %c8_19] : memref<8x32xbf16, #tpu.memory_space<vmem>>, vector<8x8xbf16>
    %cst_20 = arith.constant dense<0.000000e+00> : vector<8x8xf32>
    %38 = tpu.matmul %35, %36, %cst_20 {dimension_numbers = #tpu.dot_dimension_numbers<[1], [1], [0], [0], [0, 0, 1, 0], [], []>} : vector<8x8xbf16>, vector<8x8xbf16>, vector<8x8xf32> -> vector<8x8xf32>
    %cst_21 = arith.constant dense<0xFF800000> : vector<8xf32>
    %39 = vector.multi_reduction <maximumf>, %38, %cst_21 [1] : vector<8x8xf32> to vector<8xf32>
    %40 = vector.shape_cast %39 : vector<8xf32> to vector<8x1xf32>
    %41 = vector.broadcast %40 : vector<8x1xf32> to vector<8x8xf32>
    %42 = arith.subf %38, %41 : vector<8x8xf32>
    %43 = math.exp %42 : vector<8x8xf32>
    %cst_22 = arith.constant dense<0.000000e+00> : vector<8xf32>
    %44 = vector.multi_reduction <add>, %43, %cst_22 [1] : vector<8x8xf32> to vector<8xf32>
    %45 = vector.shape_cast %44 : vector<8xf32> to vector<8x1xf32>
    %46 = tpu.reciprocal %45 {approx = true} : vector<8x1xf32> -> vector<8x1xf32>
    %47 = vector.broadcast %46 : vector<8x1xf32> to vector<8x8xf32>
    %48 = arith.mulf %43, %47 : vector<8x8xf32>
    %49 = arith.truncf %48 : vector<8x8xf32> to vector<8x8xbf16>
    %cst_23 = arith.constant dense<0.000000e+00> : vector<8x8xf32>
    %50 = tpu.matmul %49, %37, %cst_23 {dimension_numbers = #tpu.dot_dimension_numbers<[1], [0], [0], [1], [0, 0, 1, 1], [], []>} : vector<8x8xbf16>, vector<8x8xbf16>, vector<8x8xf32> -> vector<8x8xf32>
    %c0_24 = arith.constant 0 : index
    %c8_25 = arith.constant 8 : index
    %51 = vector.load %arg14[%c0_24, %c8_25] : memref<8x32xf32, #tpu.memory_space<vmem>>, vector<8x8xf32>
    tpu.vector_store %arg14[%c0_24, %c8_25], %50 {strides = array<i32>} : memref<8x32xf32, #tpu.memory_space<vmem>>, vector<8x8xf32>,
    %52 = vector.extract_strided_slice %17 {offsets = [0, 16], sizes = [8, 8], strides = [1, 1]} : vector<8x32xbf16> to vector<8x8xbf16>
    %c0_26 = arith.constant 0 : index
    %c16 = arith.constant 16 : index
    %53 = vector.load %arg12[%c0_26, %c16] : memref<8x32xbf16, #tpu.memory_space<vmem>>, vector<8x8xbf16>
    %c0_27 = arith.constant 0 : index
    %c16_28 = arith.constant 16 : index
    %54 = vector.load %arg13[%c0_27, %c16_28] : memref<8x32xbf16, #tpu.memory_space<vmem>>, vector<8x8xbf16>
    %cst_29 = arith.constant dense<0.000000e+00> : vector<8x8xf32>
    %55 = tpu.matmul %52, %53, %cst_29 {dimension_numbers = #tpu.dot_dimension_numbers<[1], [1], [0], [0], [0, 0, 1, 0], [], []>} : vector<8x8xbf16>, vector<8x8xbf16>, vector<8x8xf32> -> vector<8x8xf32>
    %cst_30 = arith.constant dense<0xFF800000> : vector<8xf32>
    %56 = vector.multi_reduction <maximumf>, %55, %cst_30 [1] : vector<8x8xf32> to vector<8xf32>
    %57 = vector.shape_cast %56 : vector<8xf32> to vector<8x1xf32>
    %58 = vector.broadcast %57 : vector<8x1xf32> to vector<8x8xf32>
    %59 = arith.subf %55, %58 : vector<8x8xf32>
    %60 = math.exp %59 : vector<8x8xf32>
    %cst_31 = arith.constant dense<0.000000e+00> : vector<8xf32>
    %61 = vector.multi_reduction <add>, %60, %cst_31 [1] : vector<8x8xf32> to vector<8xf32>
    %62 = vector.shape_cast %61 : vector<8xf32> to vector<8x1xf32>
    %63 = tpu.reciprocal %62 {approx = true} : vector<8x1xf32> -> vector<8x1xf32>
    %64 = vector.broadcast %63 : vector<8x1xf32> to vector<8x8xf32>
    %65 = arith.mulf %60, %64 : vector<8x8xf32>
    %66 = arith.truncf %65 : vector<8x8xf32> to vector<8x8xbf16>
    %cst_32 = arith.constant dense<0.000000e+00> : vector<8x8xf32>
    %67 = tpu.matmul %66, %54, %cst_32 {dimension_numbers = #tpu.dot_dimension_numbers<[1], [0], [0], [1], [0, 0, 1, 1], [], []>} : vector<8x8xbf16>, vector<8x8xbf16>, vector<8x8xf32> -> vector<8x8xf32>
    %c0_33 = arith.constant 0 : index
    %c16_34 = arith.constant 16 : index
    %68 = vector.load %arg14[%c0_33, %c16_34] : memref<8x32xf32, #tpu.memory_space<vmem>>, vector<8x8xf32>
    tpu.vector_store %arg14[%c0_33, %c16_34], %67 {strides = array<i32>} : memref<8x32xf32, #tpu.memory_space<vmem>>, vector<8x8xf32>,
    %69 = vector.extract_strided_slice %17 {offsets = [0, 24], sizes = [8, 8], strides = [1, 1]} : vector<8x32xbf16> to vector<8x8xbf16>
    %c0_35 = arith.constant 0 : index
    %c24 = arith.constant 24 : index
    %70 = vector.load %arg12[%c0_35, %c24] : memref<8x32xbf16, #tpu.memory_space<vmem>>, vector<8x8xbf16>
    %c0_36 = arith.constant 0 : index
    %c24_37 = arith.constant 24 : index
    %71 = vector.load %arg13[%c0_36, %c24_37] : memref<8x32xbf16, #tpu.memory_space<vmem>>, vector<8x8xbf16>
    %cst_38 = arith.constant dense<0.000000e+00> : vector<8x8xf32>
    %72 = tpu.matmul %69, %70, %cst_38 {dimension_numbers = #tpu.dot_dimension_numbers<[1], [1], [0], [0], [0, 0, 1, 0], [], []>} : vector<8x8xbf16>, vector<8x8xbf16>, vector<8x8xf32> -> vector<8x8xf32>
    %cst_39 = arith.constant dense<0xFF800000> : vector<8xf32>
    %73 = vector.multi_reduction <maximumf>, %72, %cst_39 [1] : vector<8x8xf32> to vector<8xf32>
    %74 = vector.shape_cast %73 : vector<8xf32> to vector<8x1xf32>
    %75 = vector.broadcast %74 : vector<8x1xf32> to vector<8x8xf32>
    %76 = arith.subf %72, %75 : vector<8x8xf32>
    %77 = math.exp %76 : vector<8x8xf32>
    %cst_40 = arith.constant dense<0.000000e+00> : vector<8xf32>
    %78 = vector.multi_reduction <add>, %77, %cst_40 [1] : vector<8x8xf32> to vector<8xf32>
    %79 = vector.shape_cast %78 : vector<8xf32> to vector<8x1xf32>
    %80 = tpu.reciprocal %79 {approx = true} : vector<8x1xf32> -> vector<8x1xf32>
    %81 = vector.broadcast %80 : vector<8x1xf32> to vector<8x8xf32>
    %82 = arith.mulf %77, %81 : vector<8x8xf32>
    %83 = arith.truncf %82 : vector<8x8xf32> to vector<8x8xbf16>
    %cst_41 = arith.constant dense<0.000000e+00> : vector<8x8xf32>
    %84 = tpu.matmul %83, %71, %cst_41 {dimension_numbers = #tpu.dot_dimension_numbers<[1], [0], [0], [1], [0, 0, 1, 1], [], []>} : vector<8x8xbf16>, vector<8x8xbf16>, vector<8x8xf32> -> vector<8x8xf32>
    %c0_42 = arith.constant 0 : index
    %c24_43 = arith.constant 24 : index
    %85 = vector.load %arg14[%c0_42, %c24_43] : memref<8x32xf32, #tpu.memory_space<vmem>>, vector<8x8xf32>
    tpu.vector_store %arg14[%c0_42, %c24_43], %84 {strides = array<i32>} : memref<8x32xf32, #tpu.memory_space<vmem>>, vector<8x8xf32>,
    %c0_44 = arith.constant 0 : index
    %c0_45 = arith.constant 0 : index
    %86 = vector.load %arg14[%c0_44, %c0_45] : memref<8x32xf32, #tpu.memory_space<vmem>>, vector<8x32xf32>
    %87 = arith.truncf %86 : vector<8x32xf32> to vector<8x32xbf16>
    %c0_46 = arith.constant 0 : index
    %c0_47 = arith.constant 0 : index
    %88 = vector.load %arg9[%c0_46, %c0_47] : memref<32x32xbf16, #tpu.memory_space<vmem>>, vector<32x32xbf16>
    %cst_48 = arith.constant dense<0.000000e+00> : vector<8x32xf32>
    %89 = tpu.matmul %87, %88, %cst_48 {dimension_numbers = #tpu.dot_dimension_numbers<[1], [0], [0], [1], [0, 0, 1, 1], [], []>} : vector<8x32xbf16>, vector<32x32xbf16>, vector<8x32xf32> -> vector<8x32xf32>
    %c0_49 = arith.constant 0 : index
    %c0_50 = arith.constant 0 : index
    %90 = vector.load %arg10[%c0_49, %c0_50] : memref<1x32xf32, #tpu.memory_space<vmem>>, vector<1x32xf32>
    %91 = vector.shape_cast %90 : vector<1x32xf32> to vector<32xf32>
    %92 = vector.shape_cast %91 : vector<32xf32> to vector<1x32xf32>
    %93 = vector.broadcast %92 : vector<1x32xf32> to vector<8x32xf32>
    %94 = arith.addf %89, %93 : vector<8x32xf32>
    %c0_51 = arith.constant 0 : index
    %c0_52 = arith.constant 0 : index
    %c0_53 = arith.constant 0 : index
    %95 = vector.load %arg11[%c0_51, %c0_52, %c0_53] : memref<1x8x32xf32, #tpu.memory_space<vmem>>, vector<1x8x32xf32>
    %96 = vector.shape_cast %95 : vector<1x8x32xf32> to vector<8x32xf32>
    %97 = vector.shape_cast %94 : vector<8x32xf32> to vector<1x8x32xf32>
    tpu.vector_store %arg11[%c0_51, %c0_52, %c0_53], %97 {strides = array<i32>} : memref<1x8x32xf32, #tpu.memory_space<vmem>>, vector<1x8x32xf32>,
    return
  }
  func.func @transform_0(%arg0: i32, %arg1: i32) -> (i32, i32, i32) {
    %c0_i32 = arith.constant 0 : i32
    %c0_i32_0 = arith.constant 0 : i32
    %c0_i32_1 = arith.constant 0 : i32
    return %arg0, %c0_i32, %c0_i32_0 : i32, i32, i32
  }
  func.func @transform_1(%arg0: i32, %arg1: i32) -> (i32, i32) {
    %c0_i32 = arith.constant 0 : i32
    %c0_i32_0 = arith.constant 0 : i32
    %c0_i32_1 = arith.constant 0 : i32
    return %c0_i32, %c0_i32_0 : i32, i32
  }
  func.func @transform_2(%arg0: i32, %arg1: i32) -> (i32, i32) {
    %c0_i32 = arith.constant 0 : i32
    %c0_i32_0 = arith.constant 0 : i32
    %c0_i32_1 = arith.constant 0 : i32
    return %c0_i32, %c0_i32_0 : i32, i32
  }
  func.func @transform_3(%arg0: i32, %arg1: i32) -> (i32, i32) {
    %c0_i32 = arith.constant 0 : i32
    %c0_i32_0 = arith.constant 0 : i32
    %c0_i32_1 = arith.constant 0 : i32
    return %c0_i32, %c0_i32_0 : i32, i32
  }
  func.func @transform_4(%arg0: i32, %arg1: i32) -> (i32, i32) {
    %c0_i32 = arith.constant 0 : i32
    %c0_i32_0 = arith.constant 0 : i32
    %c0_i32_1 = arith.constant 0 : i32
    return %c0_i32, %c0_i32_0 : i32, i32
  }
  func.func @transform_5(%arg0: i32, %arg1: i32) -> (i32, i32) {
    %c0_i32 = arith.constant 0 : i32
    %c0_i32_0 = arith.constant 0 : i32
    %c0_i32_1 = arith.constant 0 : i32
    return %c0_i32, %c0_i32_0 : i32, i32
  }
  func.func @transform_6(%arg0: i32, %arg1: i32) -> (i32, i32) {
    %c0_i32 = arith.constant 0 : i32
    %c0_i32_0 = arith.constant 0 : i32
    %c0_i32_1 = arith.constant 0 : i32
    return %c0_i32, %c0_i32_0 : i32, i32
  }
  func.func @transform_7(%arg0: i32, %arg1: i32) -> (i32, i32) {
    %c0_i32 = arith.constant 0 : i32
    %c0_i32_0 = arith.constant 0 : i32
    %c0_i32_1 = arith.constant 0 : i32
    return %c0_i32, %c0_i32_0 : i32, i32
  }
  func.func @transform_8(%arg0: i32, %arg1: i32) -> (i32, i32) {
    %c0_i32 = arith.constant 0 : i32
    %c0_i32_0 = arith.constant 0 : i32
    %c0_i32_1 = arith.constant 0 : i32
    return %c0_i32, %c0_i32_0 : i32, i32
  }
  func.func @transform_9(%arg0: i32, %arg1: i32) -> (i32, i32, i32) {
    %c0_i32 = arith.constant 0 : i32
    %c0_i32_0 = arith.constant 0 : i32
    return %arg0, %arg1, %c0_i32 : i32, i32, i32
  }
}

</mosaic_0001>

<llo_original>
// kernel: tpu_custom_call.1
$region0: #{tpu_custom_call.1}
  #allocation0 [shape = 'u32[]', space=smem, size = 0x4, offset = 0x4, fixed_abs, tag = 'smem constant byte address 0x4 - core index']
  #allocation1 [shape = 'u32[144,128]{1,0:T(1,128)}', space=vmem, size = 0x12000, scoped, tag = 'internal scratch']
  #allocation2 [shape = 'bf16[8,32]{1,0:T(8,128)(2,1)}', space=vmem, size = 0x800, scoped, tag = 'scratch operand']
  #allocation3 [shape = 'bf16[8,32]{1,0:T(8,128)(2,1)}', space=vmem, size = 0x800, scoped, tag = 'scratch operand']
  #allocation4 [shape = 'f32[8,32]{1,0:T(8,128)}', space=vmem, size = 0x1000, scoped, tag = 'scratch operand']
  %s0 = inlined_call_operand.hbm [shape: bf16[2,8,32], index: 0, kind: input, shape index: {}]
  %s1 = inlined_call_operand.hbm [shape: bf16[32,32], index: 1, kind: input, shape index: {}]
  %s2 = inlined_call_operand.hbm [shape: f32[1,32], index: 2, kind: input, shape index: {}]
  %s3 = inlined_call_operand.hbm [shape: bf16[32,32], index: 3, kind: input, shape index: {}]
  %s4 = inlined_call_operand.hbm [shape: f32[1,32], index: 4, kind: input, shape index: {}]
  %s5 = inlined_call_operand.hbm [shape: bf16[32,32], index: 5, kind: input, shape index: {}]
  %s6 = inlined_call_operand.hbm [shape: f32[1,32], index: 6, kind: input, shape index: {}]
  %s7 = inlined_call_operand.hbm [shape: bf16[32,32], index: 7, kind: input, shape index: {}]
  %s8 = inlined_call_operand.hbm [shape: f32[1,32], index: 8, kind: input, shape index: {}]
  %s9 = inlined_call_operand.hbm [shape: f32[2,8,32], index: 9, kind: output, shape index: {}]
  %s10 = sld [smem:[#allocation0]]
  $region109: #{tpu_custom_call.1} parent=0
    _
  %s12 = ssub.s32 1, %s10
  %s13 = scalar_select 0, %s12, %s10
  $region1: #{tpu_custom_call.1} parent=0
    #allocation5 [shape = 'u8[4096]{0}', space=vmem, size = 0x1000, scoped, tag = 'input window, operand 0']
    #allocation6 [shape = 's32[2]{0}', space=sflag, size = 0x8, scoped, tag = 'scoped memory for tpu_custom_call.1']
    #allocation7 [shape = 's32[2]{0}', space=sflag, size = 0x8, scoped, tag = 'scoped memory for tpu_custom_call.1']
    #allocation8 [shape = 'u8[8192]{0}', space=vmem, size = 0x2000, scoped, tag = 'input window, operand 1, single buffered']
    #allocation9 [shape = 's32[1]{0}', space=sflag, size = 0x4, scoped, tag = 'scoped memory for tpu_custom_call.1']
    #allocation10 [shape = 'u8[512]{0}', space=vmem, size = 0x400, scoped, tag = 'input window, operand 2, single buffered']
    #allocation11 [shape = 'u8[8192]{0}', space=vmem, size = 0x2000, scoped, tag = 'input window, operand 3, single buffered']
    #allocation12 [shape = 's32[1]{0}', space=sflag, size = 0x4, scoped, tag = 'scoped memory for tpu_custom_call.1']
    #allocation13 [shape = 'u8[512]{0}', space=vmem, size = 0x400, scoped, tag = 'input window, operand 4, single buffered']
    #allocation14 [shape = 'u8[8192]{0}', space=vmem, size = 0x2000, scoped, tag = 'input window, operand 5, single buffered']
    #allocation15 [shape = 's32[1]{0}', space=sflag, size = 0x4, scoped, tag = 'scoped memory for tpu_custom_call.1']
    #allocation16 [shape = 'u8[512]{0}', space=vmem, size = 0x400, scoped, tag = 'input window, operand 6, single buffered']
    #allocation17 [shape = 'u8[8192]{0}', space=vmem, size = 0x2000, scoped, tag = 'input window, operand 7, single buffered']
    #allocation18 [shape = 's32[1]{0}', space=sflag, size = 0x4, scoped, tag = 'scoped memory for tpu_custom_call.1']
    #allocation19 [shape = 'u8[512]{0}', space=vmem, size = 0x400, scoped, tag = 'input window, operand 8, single buffered']
    #allocation20 [shape = 'u8[8192]{0}', space=vmem, size = 0x2000, scoped, tag = 'output window, operand 0']
    %14 = vsyncpa [#allocation6], 0
    %s15 = scalar_lea.sflag [#allocation6], 1
    %16 = vsyncpa %s15, 0
    %17 = vsyncpa [#allocation9], 0
    %18 = vsyncpa [#allocation12], 0
    %19 = vsyncpa [#allocation15], 0
    %20 = vsyncpa [#allocation18], 0
    %21 = vsyncpa [#allocation7], 0
    %s22 = scalar_lea.sflag [#allocation7], 1
    %23 = vsyncpa %s22, 0
    loop: start=0, step=1, limit=4
    $region2: #{tpu_custom_call.1} parent=1 // loop_pre_header
      _
    $region3: #{tpu_custom_call.1} parent=1 // loop_header
      %s25 = sphi 0, %s29
      %p26 = scmp.ge.s32.totalorder %s25, 4
      %s32 = sphi 0, %s44
      %s33 = sphi 0, %s40
      %s34 = sphi 0, %s32
      %s35 = sphi 0, %s33
      %s36 = sphi 0, %s34
      %s37 = sphi 0, %s35
      %s47 = sphi 0, %s49
      %s50 = sphi 0, %s47
      %s51 = sphi 0, %s50
      %s67 = sphi 0, %s51
      %s71 = sphi 0, %s71
      %s73 = sphi 0, %s71
      %s74 = sphi 0, %s73
      %s88 = sphi 0, %s74
      %s92 = sphi 0, %s92
      %s94 = sphi 0, %s92
      %s95 = sphi 0, %s94
      %s109 = sphi 0, %s95
      %s113 = sphi 0, %s113
      %s115 = sphi 0, %s113
      %s116 = sphi 0, %s115
      %s130 = sphi 0, %s116
      %s134 = sphi 0, %s134
      %s136 = sphi 0, %s134
      %s137 = sphi 0, %s136
      %s151 = sphi 0, %s137
      %s155 = sphi 0, %s155
      %s157 = sphi 0, %s155
      %s158 = sphi 0, %s157
      %s172 = sphi 0, %s158
      %s176 = sphi 0, %s176
      %s178 = sphi 0, %s176
      %s179 = sphi 0, %s178
      %s193 = sphi 0, %s179
      %s197 = sphi 0, %s197
      %s199 = sphi 0, %s197
      %s200 = sphi 0, %s199
      %s214 = sphi 0, %s200
      %s218 = sphi 0, %s218
      %s220 = sphi 0, %s218
      %s221 = sphi 0, %s220
      %s235 = sphi 0, %s221
      %s243 = sphi 0, %s245
      %s246 = sphi 0, %s243
      %s247 = sphi 0, %s246
      %s263 = sphi 0, %s247
    $region4: #{tpu_custom_call.1} parent=1 // loop_header_branch
      %28 = sbr.rel (%p26) target = $region8
    $region5: #{tpu_custom_call.1} parent=1 // loop_body
      %s30 = ssub.s32 %s25, 1
      %s31 = ssub.s32 %s25, 2
      %s38 = sadd.s32 1, %s33
      %p39 = scmp.ge.s32.totalorder %s38, 1
      %s40 = scalar_select %p39, 0, %s38
      %s41 = sadd.s32 1, %s32
      %s42 = scalar_select %p39, %s41, %s32
      %p43 = scmp.ge.s32.totalorder %s42, 2
      %s44 = scalar_select %p43, 0, %s42
      %s45 = ssub.s32 %s32, %s44
      %p46 = scmp.eq.s32.totalorder %s45, 0
      %s48 = sadd.s32 %s47, 1
      %s49 = scalar_select %p46, %s47, %s48
      %p52 = pneg %p46
      %p53 = scmp.eq.s32.totalorder %s25, 1
      %p54 = por %p52, %p53
      %p55 = scmp.ne.s32.totalorder %s47, %s50
      %p56 = scmp.eq.s32.totalorder %s25, 0
      %p57 = por %p55, %p56
      %p58 = scmp.ne.s32.totalorder %s47, %s50
      %p59 = scmp.eq.s32.totalorder %s30, 1
      %p60 = por %p58, %p59
      %p61 = scmp.ne.s32.totalorder %s50, %s51
      %p62 = scmp.eq.s32.totalorder %s30, 0
      %p63 = por %p61, %p62
      %p64 = scmp.ne.s32.totalorder %s50, %s51
      %p65 = scmp.eq.s32.totalorder %s31, 1
      %p66 = por %p64, %p65
      %p68 = scmp.ne.s32.totalorder %s51, %s67
      %p69 = scmp.eq.s32.totalorder %s31, 0
      %p70 = por %p68, %p69
      %s72 = sadd.s32 %s71, 1
      %p75 = scmp.eq.s32.totalorder %s25, 1
      %p76 = scmp.ne.s32.totalorder %s71, %s73
      %p77 = scmp.eq.s32.totalorder %s25, 0
      %p78 = por %p76, %p77
      %p79 = scmp.ne.s32.totalorder %s71, %s73
      %p80 = scmp.eq.s32.totalorder %s30, 1
      %p81 = por %p79, %p80
      %p82 = scmp.ne.s32.totalorder %s73, %s74
      %p83 = scmp.eq.s32.totalorder %s30, 0
      %p84 = por %p82, %p83
      %p85 = scmp.ne.s32.totalorder %s73, %s74
      %p86 = scmp.eq.s32.totalorder %s31, 1
      %p87 = por %p85, %p86
      %p89 = scmp.ne.s32.totalorder %s74, %s88
      %p90 = scmp.eq.s32.totalorder %s31, 0
      %p91 = por %p89, %p90
      %s93 = sadd.s32 %s92, 1
      %p96 = scmp.eq.s32.totalorder %s25, 1
      %p97 = scmp.ne.s32.totalorder %s92, %s94
      %p98 = scmp.eq.s32.totalorder %s25, 0
      %p99 = por %p97, %p98
      %p100 = scmp.ne.s32.totalorder %s92, %s94
      %p101 = scmp.eq.s32.totalorder %s30, 1
      %p102 = por %p100, %p101
      %p103 = scmp.ne.s32.totalorder %s94, %s95
      %p104 = scmp.eq.s32.totalorder %s30, 0
      %p105 = por %p103, %p104
      %p106 = scmp.ne.s32.totalorder %s94, %s95
      %p107 = scmp.eq.s32.totalorder %s31, 1
      %p108 = por %p106, %p107
      %p110 = scmp.ne.s32.totalorder %s95, %s109
      %p111 = scmp.eq.s32.totalorder %s31, 0
      %p112 = por %p110, %p111
      %s114 = sadd.s32 %s113, 1
      %p117 = scmp.eq.s32.totalorder %s25, 1
      %p118 = scmp.ne.s32.totalorder %s113, %s115
      %p119 = scmp.eq.s32.totalorder %s25, 0
      %p120 = por %p118, %p119
      %p121 = scmp.ne.s32.totalorder %s113, %s115
      %p122 = scmp.eq.s32.totalorder %s30, 1
      %p123 = por %p121, %p122
      %p124 = scmp.ne.s32.totalorder %s115, %s116
      %p125 = scmp.eq.s32.totalorder %s30, 0
      %p126 = por %p124, %p125
      %p127 = scmp.ne.s32.totalorder %s115, %s116
      %p128 = scmp.eq.s32.totalorder %s31, 1
      %p129 = por %p127, %p128
      %p131 = scmp.ne.s32.totalorder %s116, %s130
      %p132 = scmp.eq.s32.totalorder %s31, 0
      %p133 = por %p131, %p132
      %s135 = sadd.s32 %s134, 1
      %p138 = scmp.eq.s32.totalorder %s25, 1
      %p139 = scmp.ne.s32.totalorder %s134, %s136
      %p140 = scmp.eq.s32.totalorder %s25, 0
      %p141 = por %p139, %p140
      %p142 = scmp.ne.s32.totalorder %s134, %s136
      %p143 = scmp.eq.s32.totalorder %s30, 1
      %p144 = por %p142, %p143
      %p145 = scmp.ne.s32.totalorder %s136, %s137
      %p146 = scmp.eq.s32.totalorder %s30, 0
      %p147 = por %p145, %p146
      %p148 = scmp.ne.s32.totalorder %s136, %s137
      %p149 = scmp.eq.s32.totalorder %s31, 1
      %p150 = por %p148, %p149
      %p152 = scmp.ne.s32.totalorder %s137, %s151
      %p153 = scmp.eq.s32.totalorder %s31, 0
      %p154 = por %p152, %p153
      %s156 = sadd.s32 %s155, 1
      %p159 = scmp.eq.s32.totalorder %s25, 1
      %p160 = scmp.ne.s32.totalorder %s155, %s157
      %p161 = scmp.eq.s32.totalorder %s25, 0
      %p162 = por %p160, %p161
      %p163 = scmp.ne.s32.totalorder %s155, %s157
      %p164 = scmp.eq.s32.totalorder %s30, 1
      %p165 = por %p163, %p164
      %p166 = scmp.ne.s32.totalorder %s157, %s158
      %p167 = scmp.eq.s32.totalorder %s30, 0
      %p168 = por %p166, %p167
      %p169 = scmp.ne.s32.totalorder %s157, %s158
      %p170 = scmp.eq.s32.totalorder %s31, 1
      %p171 = por %p169, %p170
      %p173 = scmp.ne.s32.totalorder %s158, %s172
      %p174 = scmp.eq.s32.totalorder %s31, 0
      %p175 = por %p173, %p174
      %s177 = sadd.s32 %s176, 1
      %p180 = scmp.eq.s32.totalorder %s25, 1
      %p181 = scmp.ne.s32.totalorder %s176, %s178
      %p182 = scmp.eq.s32.totalorder %s25, 0
      %p183 = por %p181, %p182
      %p184 = scmp.ne.s32.totalorder %s176, %s178
      %p185 = scmp.eq.s32.totalorder %s30, 1
      %p186 = por %p184, %p185
      %p187 = scmp.ne.s32.totalorder %s178, %s179
      %p188 = scmp.eq.s32.totalorder %s30, 0
      %p189 = por %p187, %p188
      %p190 = scmp.ne.s32.totalorder %s178, %s179
      %p191 = scmp.eq.s32.totalorder %s31, 1
      %p192 = por %p190, %p191
      %p194 = scmp.ne.s32.totalorder %s179, %s193
      %p195 = scmp.eq.s32.totalorder %s31, 0
      %p196 = por %p194, %p195
      %s198 = sadd.s32 %s197, 1
      %p201 = scmp.eq.s32.totalorder %s25, 1
      %p202 = scmp.ne.s32.totalorder %s197, %s199
      %p203 = scmp.eq.s32.totalorder %s25, 0
      %p204 = por %p202, %p203
      %p205 = scmp.ne.s32.totalorder %s197, %s199
      %p206 = scmp.eq.s32.totalorder %s30, 1
      %p207 = por %p205, %p206
      %p208 = scmp.ne.s32.totalorder %s199, %s200
      %p209 = scmp.eq.s32.totalorder %s30, 0
      %p210 = por %p208, %p209
      %p211 = scmp.ne.s32.totalorder %s199, %s200
      %p212 = scmp.eq.s32.totalorder %s31, 1
      %p213 = por %p211, %p212
      %p215 = scmp.ne.s32.totalorder %s200, %s214
      %p216 = scmp.eq.s32.totalorder %s31, 0
      %p217 = por %p215, %p216
      %s219 = sadd.s32 %s218, 1
      %p222 = scmp.eq.s32.totalorder %s25, 1
      %p223 = scmp.ne.s32.totalorder %s218, %s220
      %p224 = scmp.eq.s32.totalorder %s25, 0
      %p225 = por %p223, %p224
      %p226 = scmp.ne.s32.totalorder %s218, %s220
      %p227 = scmp.eq.s32.totalorder %s30, 1
      %p228 = por %p226, %p227
      %p229 = scmp.ne.s32.totalorder %s220, %s221
      %p230 = scmp.eq.s32.totalorder %s30, 0
      %p231 = por %p229, %p230
      %p232 = scmp.ne.s32.totalorder %s220, %s221
      %p233 = scmp.eq.s32.totalorder %s31, 1
      %p234 = por %p232, %p233
      %p236 = scmp.ne.s32.totalorder %s221, %s235
      %p237 = scmp.eq.s32.totalorder %s31, 0
      %p238 = por %p236, %p237
      %s239 = ssub.s32 %s32, %s44
      %s240 = ssub.s32 %s33, %s40
      %s241 = sor.u32 %s239, %s240
      %p242 = scmp.eq.s32.totalorder %s241, 0
      %s244 = sadd.s32 %s243, 1
      %s245 = scalar_select %p242, %s243, %s244
      %p248 = pneg %p242
      %p249 = scmp.eq.s32.totalorder %s25, 1
      %p250 = por %p248, %p249
      %p251 = scmp.ne.s32.totalorder %s243, %s246
      %p252 = scmp.eq.s32.totalorder %s25, 0
      %p253 = por %p251, %p252
      %p254 = scmp.ne.s32.totalorder %s243, %s246
      %p255 = scmp.eq.s32.totalorder %s30, 1
      %p256 = por %p254, %p255
      %p257 = scmp.ne.s32.totalorder %s246, %s247
      %p258 = scmp.eq.s32.totalorder %s30, 0
      %p259 = por %p257, %p258
      %p260 = scmp.ne.s32.totalorder %s246, %s247
      %p261 = scmp.eq.s32.totalorder %s31, 1
      %p262 = por %p260, %p261
      %p264 = scmp.ne.s32.totalorder %s247, %s263
      %p265 = scmp.eq.s32.totalorder %s31, 0
      %p266 = por %p264, %p265
      %p267 = scmp.le.s32.totalorder 1, %s25
      %p268 = scmp.lt.s32.totalorder %s25, 3
      %p269 = pnand %p267, %p268
      %p270 = pneg %p269
      // Predicated region
      $region9: #{tpu_custom_call.1} parent=5 // pred_check
        _
      $region10: #{tpu_custom_call.1} parent=5 // pred_check_branch
        %272 = sbr.rel (%p269) target = $region12
      $region11: #{tpu_custom_call.1} parent=5 // pred_region
        %s273 = ssub.s32 %s25, 1
        // Predicated region
        $region13: #{tpu_custom_call.1} parent=11 // pred_check
          %p274 = pneg %p84
        $region14: #{tpu_custom_call.1} parent=11 // pred_check_branch
          %276 = sbr.rel (%p274) target = $region16
        $region15: #{tpu_custom_call.1} parent=11 // pred_region
          %s278 = ssub.s32 256, 256
          %279 = vsyncadd [#allocation9], %s278
          %s280 = sshll.u32 [#allocation8], 4
          %s281 = int_to_ptr.vmem [resolvable:$true] %s280
          %286 = dma.hbm_to_vmem [thread:$0]  %s1, 256, %s281, [#allocation9], 64, 64, 4
        $region16: #{tpu_custom_call.1} parent=11 // pred_fallthru
          _
        // Predicated region
        $region17: #{tpu_custom_call.1} parent=11 // pred_check
          %p287 = pneg %p105
        $region18: #{tpu_custom_call.1} parent=11 // pred_check_branch
          %289 = sbr.rel (%p287) target = $region20
        $region19: #{tpu_custom_call.1} parent=11 // pred_region
          %s291 = ssub.s32 16, 16
          %292 = vsyncadd [#allocation9], %s291
          %s294 = sshll.u32 [#allocation10], 4
          %s295 = int_to_ptr.vmem [resolvable:$true] %s294
          %297 = dma.hbm_to_vmem [thread:$0]  %s2, 16, %s295, [#allocation9]
        $region20: #{tpu_custom_call.1} parent=11 // pred_fallthru
          _
        // Predicated region
        $region21: #{tpu_custom_call.1} parent=11 // pred_check
          %p298 = pneg %p126
        $region22: #{tpu_custom_call.1} parent=11 // pred_check_branch
          %300 = sbr.rel (%p298) target = $region24
        $region23: #{tpu_custom_call.1} parent=11 // pred_region
          %s302 = ssub.s32 256, 256
          %303 = vsyncadd [#allocation12], %s302
          %s304 = sshll.u32 [#allocation11], 4
          %s305 = int_to_ptr.vmem [resolvable:$true] %s304
          %310 = dma.hbm_to_vmem [thread:$0]  %s3, 256, %s305, [#allocation12], 64, 64, 4
        $region24: #{tpu_custom_call.1} parent=11 // pred_fallthru
          _
        // Predicated region
        $region25: #{tpu_custom_call.1} parent=11 // pred_check
          %p311 = pneg %p147
        $region26: #{tpu_custom_call.1} parent=11 // pred_check_branch
          %313 = sbr.rel (%p311) target = $region28
        $region27: #{tpu_custom_call.1} parent=11 // pred_region
          %s315 = ssub.s32 16, 16
          %316 = vsyncadd [#allocation12], %s315
          %s318 = sshll.u32 [#allocation13], 4
          %s319 = int_to_ptr.vmem [resolvable:$true] %s318
          %321 = dma.hbm_to_vmem [thread:$0]  %s4, 16, %s319, [#allocation12]
        $region28: #{tpu_custom_call.1} parent=11 // pred_fallthru
          _
        // Predicated region
        $region29: #{tpu_custom_call.1} parent=11 // pred_check
          %p322 = pneg %p168
        $region30: #{tpu_custom_call.1} parent=11 // pred_check_branch
          %324 = sbr.rel (%p322) target = $region32
        $region31: #{tpu_custom_call.1} parent=11 // pred_region
          %s326 = ssub.s32 256, 256
          %327 = vsyncadd [#allocation15], %s326
          %s328 = sshll.u32 [#allocation14], 4
          %s329 = int_to_ptr.vmem [resolvable:$true] %s328
          %334 = dma.hbm_to_vmem [thread:$0]  %s5, 256, %s329, [#allocation15], 64, 64, 4
        $region32: #{tpu_custom_call.1} parent=11 // pred_fallthru
          _
        // Predicated region
        $region33: #{tpu_custom_call.1} parent=11 // pred_check
          %p335 = pneg %p189
        $region34: #{tpu_custom_call.1} parent=11 // pred_check_branch
          %337 = sbr.rel (%p335) target = $region36
        $region35: #{tpu_custom_call.1} parent=11 // pred_region
          %s339 = ssub.s32 16, 16
          %340 = vsyncadd [#allocation15], %s339
          %s342 = sshll.u32 [#allocation16], 4
          %s343 = int_to_ptr.vmem [resolvable:$true] %s342
          %345 = dma.hbm_to_vmem [thread:$0]  %s6, 16, %s343, [#allocation15]
        $region36: #{tpu_custom_call.1} parent=11 // pred_fallthru
          _
        // Predicated region
        $region37: #{tpu_custom_call.1} parent=11 // pred_check
          %p346 = pneg %p210
        $region38: #{tpu_custom_call.1} parent=11 // pred_check_branch
          %348 = sbr.rel (%p346) target = $region40
        $region39: #{tpu_custom_call.1} parent=11 // pred_region
          %s350 = ssub.s32 256, 256
          %351 = vsyncadd [#allocation18], %s350
          %s352 = sshll.u32 [#allocation17], 4
          %s353 = int_to_ptr.vmem [resolvable:$true] %s352
          %358 = dma.hbm_to_vmem [thread:$0]  %s7, 256, %s353, [#allocation18], 64, 64, 4
        $region40: #{tpu_custom_call.1} parent=11 // pred_fallthru
          _
        // Predicated region
        $region41: #{tpu_custom_call.1} parent=11 // pred_check
          %p359 = pneg %p231
        $region42: #{tpu_custom_call.1} parent=11 // pred_check_branch
          %361 = sbr.rel (%p359) target = $region44
        $region43: #{tpu_custom_call.1} parent=11 // pred_region
          %s363 = ssub.s32 16, 16
          %364 = vsyncadd [#allocation18], %s363
          %s366 = sshll.u32 [#allocation19], 4
          %s367 = int_to_ptr.vmem [resolvable:$true] %s366
          %369 = dma.hbm_to_vmem [thread:$0]  %s8, 16, %s367, [#allocation18]
        $region44: #{tpu_custom_call.1} parent=11 // pred_fallthru
          _
      $region12: #{tpu_custom_call.1} parent=5 // pred_fallthru
        _
      %p370 = scmp.lt.s32.totalorder %s25, 2
      // Predicated region
      $region45: #{tpu_custom_call.1} parent=5 // pred_check
        %p371 = pneg %p370
      $region46: #{tpu_custom_call.1} parent=5 // pred_check_branch
        %373 = sbr.rel (%p371) target = $region48
      $region47: #{tpu_custom_call.1} parent=5 // pred_region
        // Predicated region
        $region49: #{tpu_custom_call.1} parent=47 // pred_check
          %p374 = pneg %p57
        $region50: #{tpu_custom_call.1} parent=47 // pred_check_branch
          %376 = sbr.rel (%p374) target = $region52
        $region51: #{tpu_custom_call.1} parent=47 // pred_region
          %s377 = sand.u32 %s47, 1
          %s378 = scalar_lea.sflag [#allocation6], %s377
          %s379 = sand.u32 %s47, 1
          %s380 = smul.addr %s379, 4
          %s381 = scalar_lea.vmem [#allocation5], %s380
          %s383 = ssub.s32 64, 64
          %384 = vsyncadd %s378, %s383
          %s385 = smul.addr %s32, 64
          %s386 = scalar_lea.hbm %s0, %s385
          %s388 = sshll.u32 %s381, 4
          %s389 = int_to_ptr.vmem [resolvable:$true] %s388
          %391 = dma.hbm_to_vmem [thread:$0]  %s386, 64, %s389, %s378
        $region52: #{tpu_custom_call.1} parent=47 // pred_fallthru
          _
      $region48: #{tpu_custom_call.1} parent=5 // pred_fallthru
        _
      %p392 = scmp.le.s32.totalorder 1, %s25
      %p393 = scmp.lt.s32.totalorder %s25, 3
      %p394 = pnand %p392, %p393
      %p395 = pneg %p394
      // Predicated region
      $region53: #{tpu_custom_call.1} parent=5 // pred_check
        _
      $region54: #{tpu_custom_call.1} parent=5 // pred_check_branch
        %397 = sbr.rel (%p394) target = $region56
      $region55: #{tpu_custom_call.1} parent=5 // pred_region
        %s398 = ssub.s32 %s25, 1
        %s399 = sand.u32 %s50, 1
        %s400 = scalar_lea.sflag [#allocation6], %s399
        %s401 = sand.u32 %s50, 1
        %s402 = smul.addr %s401, 4
        %s403 = scalar_lea.vmem [#allocation5], %s402
        // Predicated region
        $region57: #{tpu_custom_call.1} parent=55 // pred_check
          %p404 = pneg %p63
        $region58: #{tpu_custom_call.1} parent=55 // pred_check_branch
          %406 = sbr.rel (%p404) target = $region60
        $region59: #{tpu_custom_call.1} parent=55 // pred_region
          %407 = dma.done %s400, 64
        $region60: #{tpu_custom_call.1} parent=55 // pred_fallthru
          _
        // Predicated region
        $region61: #{tpu_custom_call.1} parent=55 // pred_check
          %p408 = pneg %p84
        $region62: #{tpu_custom_call.1} parent=55 // pred_check_branch
          %410 = sbr.rel (%p408) target = $region64
        $region63: #{tpu_custom_call.1} parent=55 // pred_region
          %411 = dma.done [#allocation9], 256
        $region64: #{tpu_custom_call.1} parent=55 // pred_fallthru
          _
        // Predicated region
        $region65: #{tpu_custom_call.1} parent=55 // pred_check
          %p412 = pneg %p105
        $region66: #{tpu_custom_call.1} parent=55 // pred_check_branch
          %414 = sbr.rel (%p412) target = $region68
        $region67: #{tpu_custom_call.1} parent=55 // pred_region
          %415 = dma.done [#allocation9], 16
        $region68: #{tpu_custom_call.1} parent=55 // pred_fallthru
          _
        // Predicated region
        $region69: #{tpu_custom_call.1} parent=55 // pred_check
          %p416 = pneg %p126
        $region70: #{tpu_custom_call.1} parent=55 // pred_check_branch
          %418 = sbr.rel (%p416) target = $region72
        $region71: #{tpu_custom_call.1} parent=55 // pred_region
          %419 = dma.done [#allocation12], 256
        $region72: #{tpu_custom_call.1} parent=55 // pred_fallthru
          _
        // Predicated region
        $region73: #{tpu_custom_call.1} parent=55 // pred_check
          %p420 = pneg %p147
        $region74: #{tpu_custom_call.1} parent=55 // pred_check_branch
          %422 = sbr.rel (%p420) target = $region76
        $region75: #{tpu_custom_call.1} parent=55 // pred_region
          %423 = dma.done [#allocation12], 16
        $region76: #{tpu_custom_call.1} parent=55 // pred_fallthru
          _
        // Predicated region
        $region77: #{tpu_custom_call.1} parent=55 // pred_check
          %p424 = pneg %p168
        $region78: #{tpu_custom_call.1} parent=55 // pred_check_branch
          %426 = sbr.rel (%p424) target = $region80
        $region79: #{tpu_custom_call.1} parent=55 // pred_region
          %427 = dma.done [#allocation15], 256
        $region80: #{tpu_custom_call.1} parent=55 // pred_fallthru
          _
        // Predicated region
        $region81: #{tpu_custom_call.1} parent=55 // pred_check
          %p428 = pneg %p189
        $region82: #{tpu_custom_call.1} parent=55 // pred_check_branch
          %430 = sbr.rel (%p428) target = $region84
        $region83: #{tpu_custom_call.1} parent=55 // pred_region
          %431 = dma.done [#allocation15], 16
        $region84: #{tpu_custom_call.1} parent=55 // pred_fallthru
          _
        // Predicated region
        $region85: #{tpu_custom_call.1} parent=55 // pred_check
          %p432 = pneg %p210
        $region86: #{tpu_custom_call.1} parent=55 // pred_check_branch
          %434 = sbr.rel (%p432) target = $region88
        $region87: #{tpu_custom_call.1} parent=55 // pred_region
          %435 = dma.done [#allocation18], 256
        $region88: #{tpu_custom_call.1} parent=55 // pred_fallthru
          _
        // Predicated region
        $region89: #{tpu_custom_call.1} parent=55 // pred_check
          %p436 = pneg %p231
        $region90: #{tpu_custom_call.1} parent=55 // pred_check_branch
          %438 = sbr.rel (%p436) target = $region92
        $region91: #{tpu_custom_call.1} parent=55 // pred_region
          %439 = dma.done [#allocation18], 16
        $region92: #{tpu_custom_call.1} parent=55 // pred_fallthru
          _
        %s440 = sand.u32 %s50, 1
        %s441 = scalar_lea.sflag [#allocation6], %s440
        %s442 = sand.u32 %s50, 1
        %s443 = smul.addr %s442, 4
        %s444 = scalar_lea.vmem [#allocation5], %s443
        %p445 = pneg %p63
        %p446 = pneg %p60
        %p447 = pneg %p84
        %p448 = pneg %p81
        %p449 = pneg %p105
        %p450 = pneg %p102
        %p451 = pneg %p126
        %p452 = pneg %p123
        %p453 = pneg %p147
        %p454 = pneg %p144
        %p455 = pneg %p168
        %p456 = pneg %p165
        %p457 = pneg %p189
        %p458 = pneg %p186
        %p459 = pneg %p210
        %p460 = pneg %p207
        %p461 = pneg %p231
        %p462 = pneg %p228
        %p463 = pneg %p259
        %p464 = pneg %p256
        %s465 = sand.u32 %s246, 1
        %s466 = scalar_lea.sflag [#allocation7], %s465
        %s467 = sand.u32 %s246, 1
        %s468 = smul.addr %s467, 8
        %s469 = scalar_lea.vmem [#allocation20], %s468
        %p471 = scmp.eq.s32.totalorder %s35, 0
        // Predicated region
        $region93: #{tpu_custom_call.1} parent=55 // pred_check
          %p472 = pneg %p471
        $region94: #{tpu_custom_call.1} parent=55 // pred_check_branch
          %474 = sbr.rel (%p472) target = $region96
        $region95: #{tpu_custom_call.1} parent=55 // pred_region
          %v475 = vld [vmem:[%s403] sm:$0xf]
          %v476 = vld [vmem:[#allocation11] sm:$0xf]
          %v477 = vld [vmem:[#allocation11 + $0x4] sm:$0xf]
          %v478 = vld [vmem:[#allocation11 + $0x8] sm:$0xf]
          %v479 = vld [vmem:[#allocation11 + $0xc] sm:$0xf]
          %v480 = vld [vmem:[#allocation13] sm:$0x1]
          %v482 = vlaneseq
          %v483 = vshrl.u32 %v482, 7
          %v484 = vsub.s32 0, %v483
          %v485 = vrot.slane %v480, %v484
          %v491 = vunpack.c.l.b16 %v476
          %v492 = vunpack.c.l.b16 %v477
          %v493 = vunpack.c.l.b16 %v478
          %v494 = vunpack.c.l.b16 %v479
          %v495 = vpack.c.b16 %v492, %v491
          %v496 = vpack.c.b16 %v494, %v493
          %vm499 = vcmask 261120
          %v501 = vsel %vm499, %v475, 0
          %503 = vmatprep.subr.bf16.mxu0 0
          %504 = vmatpush1.bf16.msra.mxu0 %v495
          %505 = vmatprep.subr.bf16.mxu0 0
          %506 = vmatpush1.bf16.msra.mxu0 %v496
          %507 = vmatprep.subr.bf16.mxu0 0
          %508 = vmatpush1.bf16.msra.mxu0 0
          %509 = vmatprep.subr.bf16.mxu0 0
          %510 = vmatpush1.bf16.msra.mxu0 0
          %511 = vmatprep.subr.bf16.mxu0 0
          %512 = vmatpush1.bf16.msra.mxu0 0
          %513 = vmatprep.subr.bf16.mxu0 0
          %514 = vmatpush1.bf16.msra.mxu0 0
          %515 = vmatprep.subr.bf16.mxu0 0
          %516 = vmatpush1.bf16.msra.mxu0 0
          %517 = vmatprep.subr.bf16.mxu0 0
          %518 = vmatpush1.bf16.msra.mxu0 0
          %519 = vmatprep.subr.bf16.mxu0 0
          %520 = vmatpush1.bf16.msra.mxu0 0
          %521 = vmatprep.subr.bf16.mxu0 0
          %522 = vmatpush1.bf16.msra.mxu0 0
          %523 = vmatprep.subr.bf16.mxu0 0
          %524 = vmatpush1.bf16.msra.mxu0 0
          %525 = vmatprep.subr.bf16.mxu0 0
          %526 = vmatpush1.bf16.msra.mxu0 0
          %527 = vmatprep.subr.bf16.mxu0 0
          %528 = vmatpush1.bf16.msra.mxu0 0
          %529 = vmatprep.subr.bf16.mxu0 0
          %530 = vmatpush1.bf16.msra.mxu0 0
          %531 = vmatprep.subr.bf16.mxu0 0
          %532 = vmatpush1.bf16.msra.mxu0 0
          %533 = vmatprep.subr.bf16.mxu0 0
          %534 = vmatpush1.bf16.msra.mxu0 0
          %535 = vmatprep.mubr.bf16.mxu0 0
          %536 = vmatmul.mubr.bf16.gmra.mrb[0].mxu0 %v501
          %v537 = vpop.f32.mrb[0].mxu0
          %v538 = vadd.f32 %v485, %v537
          %v539 = vpop.f32.mrb[0].mxu0
          %v540 = vpop.f32.mrb[0].mxu0
          %v541 = vpop.f32.mrb[0].mxu0
          %542 = vdwg.mxu0
          %v543 = vld [vmem:[#allocation14] sm:$0xf]
          %v544 = vld [vmem:[#allocation14 + $0x4] sm:$0xf]
          %v545 = vld [vmem:[#allocation14 + $0x8] sm:$0xf]
          %v546 = vld [vmem:[#allocation14 + $0xc] sm:$0xf]
          %v547 = vld [vmem:[#allocation16] sm:$0x1]
          %v549 = vlaneseq
          %v550 = vshrl.u32 %v549, 7
          %v551 = vsub.s32 0, %v550
          %v552 = vrot.slane %v547, %v551
          %v558 = vunpack.c.l.b16 %v543
          %v559 = vunpack.c.l.b16 %v544
          %v560 = vunpack.c.l.b16 %v545
          %v561 = vunpack.c.l.b16 %v546
          %v562 = vpack.c.b16 %v559, %v558
          %v563 = vpack.c.b16 %v561, %v560
          %566 = vmatprep.subr.bf16.mxu0 0
          %567 = vmatpush1.bf16.msra.mxu0 %v562
          %568 = vmatprep.subr.bf16.mxu0 0
          %569 = vmatpush1.bf16.msra.mxu0 %v563
          %570 = vmatprep.subr.bf16.mxu0 0
          %571 = vmatpush1.bf16.msra.mxu0 0
          %572 = vmatprep.subr.bf16.mxu0 0
          %573 = vmatpush1.bf16.msra.mxu0 0
          %574 = vmatprep.subr.bf16.mxu0 0
          %575 = vmatpush1.bf16.msra.mxu0 0
          %576 = vmatprep.subr.bf16.mxu0 0
          %577 = vmatpush1.bf16.msra.mxu0 0
          %578 = vmatprep.subr.bf16.mxu0 0
          %579 = vmatpush1.bf16.msra.mxu0 0
          %580 = vmatprep.subr.bf16.mxu0 0
          %581 = vmatpush1.bf16.msra.mxu0 0
          %582 = vmatprep.subr.bf16.mxu0 0
          %583 = vmatpush1.bf16.msra.mxu0 0
          %584 = vmatprep.subr.bf16.mxu0 0
          %585 = vmatpush1.bf16.msra.mxu0 0
          %586 = vmatprep.subr.bf16.mxu0 0
          %587 = vmatpush1.bf16.msra.mxu0 0
          %588 = vmatprep.subr.bf16.mxu0 0
          %589 = vmatpush1.bf16.msra.mxu0 0
          %590 = vmatprep.subr.bf16.mxu0 0
          %591 = vmatpush1.bf16.msra.mxu0 0
          %592 = vmatprep.subr.bf16.mxu0 0
          %593 = vmatpush1.bf16.msra.mxu0 0
          %594 = vmatprep.subr.bf16.mxu0 0
          %595 = vmatpush1.bf16.msra.mxu0 0
          %596 = vmatprep.subr.bf16.mxu0 0
          %597 = vmatpush1.bf16.msra.mxu0 0
          %598 = vmatprep.mubr.bf16.mxu0 0
          %599 = vmatmul.mubr.bf16.gmra.mrb[0].mxu0 %v501
          %v600 = vpop.f32.mrb[0].mxu0
          %v601 = vadd.f32 %v552, %v600
          %v602 = vpop.f32.mrb[0].mxu0
          %v603 = vpop.f32.mrb[0].mxu0
          %v604 = vpop.f32.mrb[0].mxu0
          %605 = vdwg.mxu0
          %v606 = vpack.c.bf16 %v538, %v538
          %vm607 = vcmask 257024
          %608 = vst.msk [vmem:[#allocation2] sm:$0xf] %vm607, %v606
          %v609 = vpack.c.bf16 %v601, %v601
          %610 = vst.msk [vmem:[#allocation3] sm:$0xf] %vm607, %v609
        $region96: #{tpu_custom_call.1} parent=55 // pred_fallthru
          _
        %s611 = smul.u32 %s35, 8
        %s612 = sshra.s32 %s611, 3
        %s613 = sand.u32 %s611, 7
        %s614 = smul.addr %s612, 4
        %s615 = scalar_lea.vmem %s403, %s614 [#allocation5]
        %v616 = vld [vmem:[%s615] sm:$0xf]
        %v617 = vld [vmem:[#allocation8] sm:$0xf]
        %v618 = vld [vmem:[#allocation8 + $0x4] sm:$0xf]
        %v619 = vld [vmem:[#allocation8 + $0x8] sm:$0xf]
        %v620 = vld [vmem:[#allocation8 + $0xc] sm:$0xf]
        %v621 = vld [vmem:[#allocation10] sm:$0x1]
        %v623 = vlaneseq
        %v624 = vshrl.u32 %v623, 7
        %v625 = vsub.s32 0, %v624
        %v626 = vrot.slane %v621, %v625
        %v632 = vunpack.c.l.b16 %v617
        %v633 = vunpack.c.l.b16 %v618
        %v634 = vunpack.c.l.b16 %v619
        %v635 = vunpack.c.l.b16 %v620
        %v636 = vpack.c.b16 %v633, %v632
        %v637 = vpack.c.b16 %v635, %v634
        %vm640 = vcmask 261120
        %v642 = vsel %vm640, %v616, 0
        %644 = vmatprep.subr.bf16.mxu0 0
        %645 = vmatpush1.bf16.msra.mxu0 %v636
        %646 = vmatprep.subr.bf16.mxu0 0
        %647 = vmatpush1.bf16.msra.mxu0 %v637
        %648 = vmatprep.subr.bf16.mxu0 0
        %649 = vmatpush1.bf16.msra.mxu0 0
        %650 = vmatprep.subr.bf16.mxu0 0
        %651 = vmatpush1.bf16.msra.mxu0 0
        %652 = vmatprep.subr.bf16.mxu0 0
        %653 = vmatpush1.bf16.msra.mxu0 0
        %654 = vmatprep.subr.bf16.mxu0 0
        %655 = vmatpush1.bf16.msra.mxu0 0
        %656 = vmatprep.subr.bf16.mxu0 0
        %657 = vmatpush1.bf16.msra.mxu0 0
        %658 = vmatprep.subr.bf16.mxu0 0
        %659 = vmatpush1.bf16.msra.mxu0 0
        %660 = vmatprep.subr.bf16.mxu0 0
        %661 = vmatpush1.bf16.msra.mxu0 0
        %662 = vmatprep.subr.bf16.mxu0 0
        %663 = vmatpush1.bf16.msra.mxu0 0
        %664 = vmatprep.subr.bf16.mxu0 0
        %665 = vmatpush1.bf16.msra.mxu0 0
        %666 = vmatprep.subr.bf16.mxu0 0
        %667 = vmatpush1.bf16.msra.mxu0 0
        %668 = vmatprep.subr.bf16.mxu0 0
        %669 = vmatpush1.bf16.msra.mxu0 0
        %670 = vmatprep.subr.bf16.mxu0 0
        %671 = vmatpush1.bf16.msra.mxu0 0
        %672 = vmatprep.subr.bf16.mxu0 0
        %673 = vmatpush1.bf16.msra.mxu0 0
        %674 = vmatprep.subr.bf16.mxu0 0
        %675 = vmatpush1.bf16.msra.mxu0 0
        %676 = vmatprep.mubr.bf16.mxu0 0
        %677 = vmatmul.mubr.bf16.gmra.mrb[0].mxu0 %v642
        %v678 = vpop.f32.mrb[0].mxu0
        %v679 = vadd.f32 %v626, %v678
        %v680 = vpop.f32.mrb[0].mxu0
        %v681 = vpop.f32.mrb[0].mxu0
        %v682 = vpop.f32.mrb[0].mxu0
        %683 = vdwg.mxu0
        %v684 = vmul.f32 %v679, 0.35355338
        %v685 = vpack.c.bf16 %v684, %v684
        %v686 = vld [vmem:[#allocation2] sm:$0xf]
        %v687 = vld [vmem:[#allocation3] sm:$0xf]
        %vm688 = vcmask 64512
        %v690 = vsel %vm688, %v685, 0
        %v693 = vsel %vm688, %v686, 0
        %695 = vmatprep.subr.bf16.mxu0 0
        %696 = vmatpush1.bf16.xpose.msra.mxu0 %v693
        %697 = vmatprep.subr.bf16.mxu0 0
        %698 = vmatpush1.bf16.xpose.msra.mxu0 0
        %699 = vmatprep.subr.bf16.mxu0 0
        %700 = vmatpush1.bf16.xpose.msra.mxu0 0
        %701 = vmatprep.subr.bf16.mxu0 0
        %702 = vmatpush1.bf16.xpose.msra.mxu0 0
        %703 = vmatprep.subr.bf16.mxu0 0
        %704 = vmatpush1.bf16.xpose.msra.mxu0 0
        %705 = vmatprep.subr.bf16.mxu0 0
        %706 = vmatpush1.bf16.xpose.msra.mxu0 0
        %707 = vmatprep.subr.bf16.mxu0 0
        %708 = vmatpush1.bf16.xpose.msra.mxu0 0
        %709 = vmatprep.subr.bf16.mxu0 0
        %710 = vmatpush1.bf16.xpose.msra.mxu0 0
        %711 = vmatprep.subr.bf16.mxu0 0
        %712 = vmatpush1.bf16.xpose.msra.mxu0 0
        %713 = vmatprep.subr.bf16.mxu0 0
        %714 = vmatpush1.bf16.xpose.msra.mxu0 0
        %715 = vmatprep.subr.bf16.mxu0 0
        %716 = vmatpush1.bf16.xpose.msra.mxu0 0
        %717 = vmatprep.subr.bf16.mxu0 0
        %718 = vmatpush1.bf16.xpose.msra.mxu0 0
        %719 = vmatprep.subr.bf16.mxu0 0
        %720 = vmatpush1.bf16.xpose.msra.mxu0 0
        %721 = vmatprep.subr.bf16.mxu0 0
        %722 = vmatpush1.bf16.xpose.msra.mxu0 0
        %723 = vmatprep.subr.bf16.mxu0 0
        %724 = vmatpush1.bf16.xpose.msra.mxu0 0
        %725 = vmatprep.subr.bf16.mxu0 0
        %726 = vmatpush1.bf16.xpose.msra.mxu0 0
        %727 = vmatprep.mubr.bf16.mxu0 0
        %728 = vmatmul.mubr.bf16.gmra.mrb[0].mxu0 %v690
        %v729 = vpop.f32.mrb[0].mxu0
        %v730 = vadd.f32 0.0, %v729
        %v731 = vpop.f32.mrb[0].mxu0
        %v732 = vpop.f32.mrb[0].mxu0
        %v733 = vpop.f32.mrb[0].mxu0
        %734 = vdwg.mxu0
        %v735 = vsel %vm688, %v730, -inf
        %736 = vmax.xlane.f32.xlu0 %v735
        %v737 = vpop.xlane.xlu0 %736
        %v738 = vsub.f32 %v730, %v737
        %v739 = vmul.f32 %v738, 1.442695
        %v740 = vpow.pop %v739
        %v741 = vsel %vm688, %v740, 0.0
        %742 = vadd.xlane.f32.xlu0 %v741
        %v743 = vpop.xlane.xlu0 %742
        %v744 = vrcp.pop %v743
        %v745 = vmul.f32 %v740, %v744
        %v746 = vpack.c.bf16 %v745, %v745
        %v748 = vsel %vm688, %v746, 0
        %vm750 = vcmask 1043456
        %v752 = vsel %vm750, %v687, 0
        %754 = vmatprep.subr.bf16.mxu0 0
        %755 = vmatpush1.bf16.msra.mxu0 %v752
        %756 = vmatprep.subr.bf16.mxu0 0
        %757 = vmatpush1.bf16.msra.mxu0 0
        %758 = vmatprep.subr.bf16.mxu0 0
        %759 = vmatpush1.bf16.msra.mxu0 0
        %760 = vmatprep.subr.bf16.mxu0 0
        %761 = vmatpush1.bf16.msra.mxu0 0
        %762 = vmatprep.subr.bf16.mxu0 0
        %763 = vmatpush1.bf16.msra.mxu0 0
        %764 = vmatprep.subr.bf16.mxu0 0
        %765 = vmatpush1.bf16.msra.mxu0 0
        %766 = vmatprep.subr.bf16.mxu0 0
        %767 = vmatpush1.bf16.msra.mxu0 0
        %768 = vmatprep.subr.bf16.mxu0 0
        %769 = vmatpush1.bf16.msra.mxu0 0
        %770 = vmatprep.subr.bf16.mxu0 0
        %771 = vmatpush1.bf16.msra.mxu0 0
        %772 = vmatprep.subr.bf16.mxu0 0
        %773 = vmatpush1.bf16.msra.mxu0 0
        %774 = vmatprep.subr.bf16.mxu0 0
        %775 = vmatpush1.bf16.msra.mxu0 0
        %776 = vmatprep.subr.bf16.mxu0 0
        %777 = vmatpush1.bf16.msra.mxu0 0
        %778 = vmatprep.subr.bf16.mxu0 0
        %779 = vmatpush1.bf16.msra.mxu0 0
        %780 = vmatprep.subr.bf16.mxu0 0
        %781 = vmatpush1.bf16.msra.mxu0 0
        %782 = vmatprep.subr.bf16.mxu0 0
        %783 = vmatpush1.bf16.msra.mxu0 0
        %784 = vmatprep.subr.bf16.mxu0 0
        %785 = vmatpush1.bf16.msra.mxu0 0
        %786 = vmatprep.mubr.bf16.mxu0 0
        %787 = vmatmul.mubr.bf16.gmra.mrb[0].mxu0 %v748
        %v788 = vpop.f32.mrb[0].mxu0
        %v789 = vadd.f32 0.0, %v788
        %v790 = vpop.f32.mrb[0].mxu0
        %v791 = vpop.f32.mrb[0].mxu0
        %v792 = vpop.f32.mrb[0].mxu0
        %793 = vdwg.mxu0
        %794 = vst.msk [vmem:[#allocation4] sm:$0xff] %vm688, %v789
        %v795 = vld [vmem:[#allocation2] sm:$0xf]
        %v796 = vld [vmem:[#allocation3] sm:$0xf]
        %798 = vrot.lane.b32.xlu0 %v685, 120
        %v799 = vpop.permute.xlu0 %798
        %v801 = vunpack.c.l.b16 %v795
        %v802 = vpack.c.b16 %v801, %v801
        %803 = vrot.lane.b32.xlu0 %v802, 120
        %v804 = vpop.permute.xlu0 %803
        %v806 = vsel %vm688, %v799, 0
        %v809 = vsel %vm688, %v804, 0
        %811 = vmatprep.subr.bf16.mxu0 0
        %812 = vmatpush1.bf16.xpose.msra.mxu0 %v809
        %813 = vmatprep.subr.bf16.mxu0 0
        %814 = vmatpush1.bf16.xpose.msra.mxu0 0
        %815 = vmatprep.subr.bf16.mxu0 0
        %816 = vmatpush1.bf16.xpose.msra.mxu0 0
        %817 = vmatprep.subr.bf16.mxu0 0
        %818 = vmatpush1.bf16.xpose.msra.mxu0 0
        %819 = vmatprep.subr.bf16.mxu0 0
        %820 = vmatpush1.bf16.xpose.msra.mxu0 0
        %821 = vmatprep.subr.bf16.mxu0 0
        %822 = vmatpush1.bf16.xpose.msra.mxu0 0
        %823 = vmatprep.subr.bf16.mxu0 0
        %824 = vmatpush1.bf16.xpose.msra.mxu0 0
        %825 = vmatprep.subr.bf16.mxu0 0
        %826 = vmatpush1.bf16.xpose.msra.mxu0 0
        %827 = vmatprep.subr.bf16.mxu0 0
        %828 = vmatpush1.bf16.xpose.msra.mxu0 0
        %829 = vmatprep.subr.bf16.mxu0 0
        %830 = vmatpush1.bf16.xpose.msra.mxu0 0
        %831 = vmatprep.subr.bf16.mxu0 0
        %832 = vmatpush1.bf16.xpose.msra.mxu0 0
        %833 = vmatprep.subr.bf16.mxu0 0
        %834 = vmatpush1.bf16.xpose.msra.mxu0 0
        %835 = vmatprep.subr.bf16.mxu0 0
        %836 = vmatpush1.bf16.xpose.msra.mxu0 0
        %837 = vmatprep.subr.bf16.mxu0 0
        %838 = vmatpush1.bf16.xpose.msra.mxu0 0
        %839 = vmatprep.subr.bf16.mxu0 0
        %840 = vmatpush1.bf16.xpose.msra.mxu0 0
        %841 = vmatprep.subr.bf16.mxu0 0
        %842 = vmatpush1.bf16.xpose.msra.mxu0 0
        %843 = vmatprep.mubr.bf16.mxu0 0
        %844 = vmatmul.mubr.bf16.gmra.mrb[0].mxu0 %v806
        %v845 = vpop.f32.mrb[0].mxu0
        %v846 = vadd.f32 0.0, %v845
        %v847 = vpop.f32.mrb[0].mxu0
        %v848 = vpop.f32.mrb[0].mxu0
        %v849 = vpop.f32.mrb[0].mxu0
        %850 = vdwg.mxu0
        %v851 = vsel %vm688, %v846, -inf
        %852 = vmax.xlane.f32.xlu0 %v851
        %v853 = vpop.xlane.xlu0 %852
        %v854 = vsub.f32 %v846, %v853
        %v855 = vmul.f32 %v854, 1.442695
        %v856 = vpow.pop %v855
        %v857 = vsel %vm688, %v856, 0.0
        %858 = vadd.xlane.f32.xlu0 %v857
        %v859 = vpop.xlane.xlu0 %858
        %v860 = vrcp.pop %v859
        %v861 = vmul.f32 %v856, %v860
        %v862 = vpack.c.bf16 %v861, %v861
        %v864 = vunpack.c.l.b16 %v796
        %v865 = vpack.c.b16 %v864, %v864
        %866 = vrot.lane.b32.xlu0 %v865, 120
        %v867 = vpop.permute.xlu0 %866
        %v869 = vsel %vm688, %v862, 0
        %v872 = vsel %vm750, %v867, 0
        %874 = vmatprep.subr.bf16.mxu0 0
        %875 = vmatpush1.bf16.msra.mxu0 %v872
        %876 = vmatprep.subr.bf16.mxu0 0
        %877 = vmatpush1.bf16.msra.mxu0 0
        %878 = vmatprep.subr.bf16.mxu0 0
        %879 = vmatpush1.bf16.msra.mxu0 0
        %880 = vmatprep.subr.bf16.mxu0 0
        %881 = vmatpush1.bf16.msra.mxu0 0
        %882 = vmatprep.subr.bf16.mxu0 0
        %883 = vmatpush1.bf16.msra.mxu0 0
        %884 = vmatprep.subr.bf16.mxu0 0
        %885 = vmatpush1.bf16.msra.mxu0 0
        %886 = vmatprep.subr.bf16.mxu0 0
        %887 = vmatpush1.bf16.msra.mxu0 0
        %888 = vmatprep.subr.bf16.mxu0 0
        %889 = vmatpush1.bf16.msra.mxu0 0
        %890 = vmatprep.subr.bf16.mxu0 0
        %891 = vmatpush1.bf16.msra.mxu0 0
        %892 = vmatprep.subr.bf16.mxu0 0
        %893 = vmatpush1.bf16.msra.mxu0 0
        %894 = vmatprep.subr.bf16.mxu0 0
        %895 = vmatpush1.bf16.msra.mxu0 0
        %896 = vmatprep.subr.bf16.mxu0 0
        %897 = vmatpush1.bf16.msra.mxu0 0
        %898 = vmatprep.subr.bf16.mxu0 0
        %899 = vmatpush1.bf16.msra.mxu0 0
        %900 = vmatprep.subr.bf16.mxu0 0
        %901 = vmatpush1.bf16.msra.mxu0 0
        %902 = vmatprep.subr.bf16.mxu0 0
        %903 = vmatpush1.bf16.msra.mxu0 0
        %904 = vmatprep.subr.bf16.mxu0 0
        %905 = vmatpush1.bf16.msra.mxu0 0
        %906 = vmatprep.mubr.bf16.mxu0 0
        %907 = vmatmul.mubr.bf16.gmra.mrb[0].mxu0 %v869
        %v908 = vpop.f32.mrb[0].mxu0
        %v909 = vadd.f32 0.0, %v908
        %v910 = vpop.f32.mrb[0].mxu0
        %v911 = vpop.f32.mrb[0].mxu0
        %v912 = vpop.f32.mrb[0].mxu0
        %913 = vdwg.mxu0
        %915 = vrot.lane.b32.xlu0 %v909, 8
        %v916 = vpop.permute.xlu0 %915
        %vm918 = vcmask 130112
        %919 = vst.msk [vmem:[#allocation4] sm:$0xff] %vm918, %v916
        %v920 = vld [vmem:[#allocation2] sm:$0xf]
        %v921 = vld [vmem:[#allocation3] sm:$0xf]
        %922 = vrot.lane.b32.xlu0 %v685, 112
        %v923 = vpop.permute.xlu0 %922
        %v925 = vunpack.c.l.b16 %v920
        %v926 = vpack.c.b16 %v925, %v925
        %927 = vrot.lane.b32.xlu0 %v926, 112
        %v928 = vpop.permute.xlu0 %927
        %v930 = vsel %vm688, %v923, 0
        %v933 = vsel %vm688, %v928, 0
        %935 = vmatprep.subr.bf16.mxu0 0
        %936 = vmatpush1.bf16.xpose.msra.mxu0 %v933
        %937 = vmatprep.subr.bf16.mxu0 0
        %938 = vmatpush1.bf16.xpose.msra.mxu0 0
        %939 = vmatprep.subr.bf16.mxu0 0
        %940 = vmatpush1.bf16.xpose.msra.mxu0 0
        %941 = vmatprep.subr.bf16.mxu0 0
        %942 = vmatpush1.bf16.xpose.msra.mxu0 0
        %943 = vmatprep.subr.bf16.mxu0 0
        %944 = vmatpush1.bf16.xpose.msra.mxu0 0
        %945 = vmatprep.subr.bf16.mxu0 0
        %946 = vmatpush1.bf16.xpose.msra.mxu0 0
        %947 = vmatprep.subr.bf16.mxu0 0
        %948 = vmatpush1.bf16.xpose.msra.mxu0 0
        %949 = vmatprep.subr.bf16.mxu0 0
        %950 = vmatpush1.bf16.xpose.msra.mxu0 0
        %951 = vmatprep.subr.bf16.mxu0 0
        %952 = vmatpush1.bf16.xpose.msra.mxu0 0
        %953 = vmatprep.subr.bf16.mxu0 0
        %954 = vmatpush1.bf16.xpose.msra.mxu0 0
        %955 = vmatprep.subr.bf16.mxu0 0
        %956 = vmatpush1.bf16.xpose.msra.mxu0 0
        %957 = vmatprep.subr.bf16.mxu0 0
        %958 = vmatpush1.bf16.xpose.msra.mxu0 0
        %959 = vmatprep.subr.bf16.mxu0 0
        %960 = vmatpush1.bf16.xpose.msra.mxu0 0
        %961 = vmatprep.subr.bf16.mxu0 0
        %962 = vmatpush1.bf16.xpose.msra.mxu0 0
        %963 = vmatprep.subr.bf16.mxu0 0
        %964 = vmatpush1.bf16.xpose.msra.mxu0 0
        %965 = vmatprep.subr.bf16.mxu0 0
        %966 = vmatpush1.bf16.xpose.msra.mxu0 0
        %967 = vmatprep.mubr.bf16.mxu0 0
        %968 = vmatmul.mubr.bf16.gmra.mrb[0].mxu0 %v930
        %v969 = vpop.f32.mrb[0].mxu0
        %v970 = vadd.f32 0.0, %v969
        %v971 = vpop.f32.mrb[0].mxu0
        %v972 = vpop.f32.mrb[0].mxu0
        %v973 = vpop.f32.mrb[0].mxu0
        %974 = vdwg.mxu0
        %v975 = vsel %vm688, %v970, -inf
        %976 = vmax.xlane.f32.xlu0 %v975
        %v977 = vpop.xlane.xlu0 %976
        %v978 = vsub.f32 %v970, %v977
        %v979 = vmul.f32 %v978, 1.442695
        %v980 = vpow.pop %v979
        %v981 = vsel %vm688, %v980, 0.0
        %982 = vadd.xlane.f32.xlu0 %v981
        %v983 = vpop.xlane.xlu0 %982
        %v984 = vrcp.pop %v983
        %v985 = vmul.f32 %v980, %v984
        %v986 = vpack.c.bf16 %v985, %v985
        %v988 = vunpack.c.l.b16 %v921
        %v989 = vpack.c.b16 %v988, %v988
        %990 = vrot.lane.b32.xlu0 %v989, 112
        %v991 = vpop.permute.xlu0 %990
        %v993 = vsel %vm688, %v986, 0
        %v996 = vsel %vm750, %v991, 0
        %998 = vmatprep.subr.bf16.mxu0 0
        %999 = vmatpush1.bf16.msra.mxu0 %v996
        %1000 = vmatprep.subr.bf16.mxu0 0
        %1001 = vmatpush1.bf16.msra.mxu0 0
        %1002 = vmatprep.subr.bf16.mxu0 0
        %1003 = vmatpush1.bf16.msra.mxu0 0
        %1004 = vmatprep.subr.bf16.mxu0 0
        %1005 = vmatpush1.bf16.msra.mxu0 0
        %1006 = vmatprep.subr.bf16.mxu0 0
        %1007 = vmatpush1.bf16.msra.mxu0 0
        %1008 = vmatprep.subr.bf16.mxu0 0
        %1009 = vmatpush1.bf16.msra.mxu0 0
        %1010 = vmatprep.subr.bf16.mxu0 0
        %1011 = vmatpush1.bf16.msra.mxu0 0
        %1012 = vmatprep.subr.bf16.mxu0 0
        %1013 = vmatpush1.bf16.msra.mxu0 0
        %1014 = vmatprep.subr.bf16.mxu0 0
        %1015 = vmatpush1.bf16.msra.mxu0 0
        %1016 = vmatprep.subr.bf16.mxu0 0
        %1017 = vmatpush1.bf16.msra.mxu0 0
        %1018 = vmatprep.subr.bf16.mxu0 0
        %1019 = vmatpush1.bf16.msra.mxu0 0
        %1020 = vmatprep.subr.bf16.mxu0 0
        %1021 = vmatpush1.bf16.msra.mxu0 0
        %1022 = vmatprep.subr.bf16.mxu0 0
        %1023 = vmatpush1.bf16.msra.mxu0 0
        %1024 = vmatprep.subr.bf16.mxu0 0
        %1025 = vmatpush1.bf16.msra.mxu0 0
        %1026 = vmatprep.subr.bf16.mxu0 0
        %1027 = vmatpush1.bf16.msra.mxu0 0
        %1028 = vmatprep.subr.bf16.mxu0 0
        %1029 = vmatpush1.bf16.msra.mxu0 0
        %1030 = vmatprep.mubr.bf16.mxu0 0
        %1031 = vmatmul.mubr.bf16.gmra.mrb[0].mxu0 %v993
        %v1032 = vpop.f32.mrb[0].mxu0
        %v1033 = vadd.f32 0.0, %v1032
        %v1034 = vpop.f32.mrb[0].mxu0
        %v1035 = vpop.f32.mrb[0].mxu0
        %v1036 = vpop.f32.mrb[0].mxu0
        %1037 = vdwg.mxu0
        %1039 = vrot.lane.b32.xlu0 %v1033, 16
        %v1040 = vpop.permute.xlu0 %1039
        %vm1042 = vcmask 195712
        %1043 = vst.msk [vmem:[#allocation4] sm:$0xff] %vm1042, %v1040
        %v1044 = vld [vmem:[#allocation2] sm:$0xf]
        %v1045 = vld [vmem:[#allocation3] sm:$0xf]
        %1046 = vrot.lane.b32.xlu0 %v685, 104
        %v1047 = vpop.permute.xlu0 %1046
        %v1049 = vunpack.c.l.b16 %v1044
        %v1050 = vpack.c.b16 %v1049, %v1049
        %1051 = vrot.lane.b32.xlu0 %v1050, 104
        %v1052 = vpop.permute.xlu0 %1051
        %v1054 = vsel %vm688, %v1047, 0
        %v1057 = vsel %vm688, %v1052, 0
        %1059 = vmatprep.subr.bf16.mxu0 0
        %1060 = vmatpush1.bf16.xpose.msra.mxu0 %v1057
        %1061 = vmatprep.subr.bf16.mxu0 0
        %1062 = vmatpush1.bf16.xpose.msra.mxu0 0
        %1063 = vmatprep.subr.bf16.mxu0 0
        %1064 = vmatpush1.bf16.xpose.msra.mxu0 0
        %1065 = vmatprep.subr.bf16.mxu0 0
        %1066 = vmatpush1.bf16.xpose.msra.mxu0 0
        %1067 = vmatprep.subr.bf16.mxu0 0
        %1068 = vmatpush1.bf16.xpose.msra.mxu0 0
        %1069 = vmatprep.subr.bf16.mxu0 0
        %1070 = vmatpush1.bf16.xpose.msra.mxu0 0
        %1071 = vmatprep.subr.bf16.mxu0 0
        %1072 = vmatpush1.bf16.xpose.msra.mxu0 0
        %1073 = vmatprep.subr.bf16.mxu0 0
        %1074 = vmatpush1.bf16.xpose.msra.mxu0 0
        %1075 = vmatprep.subr.bf16.mxu0 0
        %1076 = vmatpush1.bf16.xpose.msra.mxu0 0
        %1077 = vmatprep.subr.bf16.mxu0 0
        %1078 = vmatpush1.bf16.xpose.msra.mxu0 0
        %1079 = vmatprep.subr.bf16.mxu0 0
        %1080 = vmatpush1.bf16.xpose.msra.mxu0 0
        %1081 = vmatprep.subr.bf16.mxu0 0
        %1082 = vmatpush1.bf16.xpose.msra.mxu0 0
        %1083 = vmatprep.subr.bf16.mxu0 0
        %1084 = vmatpush1.bf16.xpose.msra.mxu0 0
        %1085 = vmatprep.subr.bf16.mxu0 0
        %1086 = vmatpush1.bf16.xpose.msra.mxu0 0
        %1087 = vmatprep.subr.bf16.mxu0 0
        %1088 = vmatpush1.bf16.xpose.msra.mxu0 0
        %1089 = vmatprep.subr.bf16.mxu0 0
        %1090 = vmatpush1.bf16.xpose.msra.mxu0 0
        %1091 = vmatprep.mubr.bf16.mxu0 0
        %1092 = vmatmul.mubr.bf16.gmra.mrb[0].mxu0 %v1054
        %v1093 = vpop.f32.mrb[0].mxu0
        %v1094 = vadd.f32 0.0, %v1093
        %v1095 = vpop.f32.mrb[0].mxu0
        %v1096 = vpop.f32.mrb[0].mxu0
        %v1097 = vpop.f32.mrb[0].mxu0
        %1098 = vdwg.mxu0
        %v1099 = vsel %vm688, %v1094, -inf
        %1100 = vmax.xlane.f32.xlu0 %v1099
        %v1101 = vpop.xlane.xlu0 %1100
        %v1102 = vsub.f32 %v1094, %v1101
        %v1103 = vmul.f32 %v1102, 1.442695
        %v1104 = vpow.pop %v1103
        %v1105 = vsel %vm688, %v1104, 0.0
        %1106 = vadd.xlane.f32.xlu0 %v1105
        %v1107 = vpop.xlane.xlu0 %1106
        %v1108 = vrcp.pop %v1107
        %v1109 = vmul.f32 %v1104, %v1108
        %v1110 = vpack.c.bf16 %v1109, %v1109
        %v1112 = vunpack.c.l.b16 %v1045
        %v1113 = vpack.c.b16 %v1112, %v1112
        %1114 = vrot.lane.b32.xlu0 %v1113, 104
        %v1115 = vpop.permute.xlu0 %1114
        %v1117 = vsel %vm688, %v1110, 0
        %v1120 = vsel %vm750, %v1115, 0
        %1122 = vmatprep.subr.bf16.mxu0 0
        %1123 = vmatpush1.bf16.msra.mxu0 %v1120
        %1124 = vmatprep.subr.bf16.mxu0 0
        %1125 = vmatpush1.bf16.msra.mxu0 0
        %1126 = vmatprep.subr.bf16.mxu0 0
        %1127 = vmatpush1.bf16.msra.mxu0 0
        %1128 = vmatprep.subr.bf16.mxu0 0
        %1129 = vmatpush1.bf16.msra.mxu0 0
        %1130 = vmatprep.subr.bf16.mxu0 0
        %1131 = vmatpush1.bf16.msra.mxu0 0
        %1132 = vmatprep.subr.bf16.mxu0 0
        %1133 = vmatpush1.bf16.msra.mxu0 0
        %1134 = vmatprep.subr.bf16.mxu0 0
        %1135 = vmatpush1.bf16.msra.mxu0 0
        %1136 = vmatprep.subr.bf16.mxu0 0
        %1137 = vmatpush1.bf16.msra.mxu0 0
        %1138 = vmatprep.subr.bf16.mxu0 0
        %1139 = vmatpush1.bf16.msra.mxu0 0
        %1140 = vmatprep.subr.bf16.mxu0 0
        %1141 = vmatpush1.bf16.msra.mxu0 0
        %1142 = vmatprep.subr.bf16.mxu0 0
        %1143 = vmatpush1.bf16.msra.mxu0 0
        %1144 = vmatprep.subr.bf16.mxu0 0
        %1145 = vmatpush1.bf16.msra.mxu0 0
        %1146 = vmatprep.subr.bf16.mxu0 0
        %1147 = vmatpush1.bf16.msra.mxu0 0
        %1148 = vmatprep.subr.bf16.mxu0 0
        %1149 = vmatpush1.bf16.msra.mxu0 0
        %1150 = vmatprep.subr.bf16.mxu0 0
        %1151 = vmatpush1.bf16.msra.mxu0 0
        %1152 = vmatprep.subr.bf16.mxu0 0
        %1153 = vmatpush1.bf16.msra.mxu0 0
        %1154 = vmatprep.mubr.bf16.mxu0 0
        %1155 = vmatmul.mubr.bf16.gmra.mrb[0].mxu0 %v1117
        %v1156 = vpop.f32.mrb[0].mxu0
        %v1157 = vadd.f32 0.0, %v1156
        %v1158 = vpop.f32.mrb[0].mxu0
        %v1159 = vpop.f32.mrb[0].mxu0
        %v1160 = vpop.f32.mrb[0].mxu0
        %1161 = vdwg.mxu0
        %1163 = vrot.lane.b32.xlu0 %v1157, 24
        %v1164 = vpop.permute.xlu0 %1163
        %vm1166 = vcmask 261312
        %1167 = vst.msk [vmem:[#allocation4] sm:$0xff] %vm1166, %v1164
        %v1168 = vld [vmem:[#allocation4] sm:$0xff]
        %v1169 = vpack.c.bf16 %v1168, %v1168
        %v1170 = vld [vmem:[#allocation17] sm:$0xf]
        %v1171 = vld [vmem:[#allocation17 + $0x4] sm:$0xf]
        %v1172 = vld [vmem:[#allocation17 + $0x8] sm:$0xf]
        %v1173 = vld [vmem:[#allocation17 + $0xc] sm:$0xf]
        %v1174 = vld [vmem:[#allocation19] sm:$0x1]
        %v1176 = vlaneseq
        %v1177 = vshrl.u32 %v1176, 7
        %v1178 = vsub.s32 0, %v1177
        %v1179 = vrot.slane %v1174, %v1178
        %v1185 = vunpack.c.l.b16 %v1170
        %v1186 = vunpack.c.l.b16 %v1171
        %v1187 = vunpack.c.l.b16 %v1172
        %v1188 = vunpack.c.l.b16 %v1173
        %v1189 = vpack.c.b16 %v1186, %v1185
        %v1190 = vpack.c.b16 %v1188, %v1187
        %v1194 = vsel %vm640, %v1169, 0
        %1196 = vmatprep.subr.bf16.mxu0 0
        %1197 = vmatpush1.bf16.msra.mxu0 %v1189
        %1198 = vmatprep.subr.bf16.mxu0 0
        %1199 = vmatpush1.bf16.msra.mxu0 %v1190
        %1200 = vmatprep.subr.bf16.mxu0 0
        %1201 = vmatpush1.bf16.msra.mxu0 0
        %1202 = vmatprep.subr.bf16.mxu0 0
        %1203 = vmatpush1.bf16.msra.mxu0 0
        %1204 = vmatprep.subr.bf16.mxu0 0
        %1205 = vmatpush1.bf16.msra.mxu0 0
        %1206 = vmatprep.subr.bf16.mxu0 0
        %1207 = vmatpush1.bf16.msra.mxu0 0
        %1208 = vmatprep.subr.bf16.mxu0 0
        %1209 = vmatpush1.bf16.msra.mxu0 0
        %1210 = vmatprep.subr.bf16.mxu0 0
        %1211 = vmatpush1.bf16.msra.mxu0 0
        %1212 = vmatprep.subr.bf16.mxu0 0
        %1213 = vmatpush1.bf16.msra.mxu0 0
        %1214 = vmatprep.subr.bf16.mxu0 0
        %1215 = vmatpush1.bf16.msra.mxu0 0
        %1216 = vmatprep.subr.bf16.mxu0 0
        %1217 = vmatpush1.bf16.msra.mxu0 0
        %1218 = vmatprep.subr.bf16.mxu0 0
        %1219 = vmatpush1.bf16.msra.mxu0 0
        %1220 = vmatprep.subr.bf16.mxu0 0
        %1221 = vmatpush1.bf16.msra.mxu0 0
        %1222 = vmatprep.subr.bf16.mxu0 0
        %1223 = vmatpush1.bf16.msra.mxu0 0
        %1224 = vmatprep.subr.bf16.mxu0 0
        %1225 = vmatpush1.bf16.msra.mxu0 0
        %1226 = vmatprep.subr.bf16.mxu0 0
        %1227 = vmatpush1.bf16.msra.mxu0 0
        %1228 = vmatprep.mubr.bf16.mxu0 0
        %1229 = vmatmul.mubr.bf16.gmra.mrb[0].mxu0 %v1194
        %v1230 = vpop.f32.mrb[0].mxu0
        %v1231 = vadd.f32 %v1179, %v1230
        %v1232 = vpop.f32.mrb[0].mxu0
        %v1233 = vpop.f32.mrb[0].mxu0
        %v1234 = vpop.f32.mrb[0].mxu0
        %1235 = vdwg.mxu0
        %1236 = vst.msk [vmem:[%s469] sm:$0xff] %vm640, %v1231
        %s1237 = sand.u32 %s246, 1
        %s1238 = scalar_lea.sflag [#allocation7], %s1237
        %s1239 = sand.u32 %s246, 1
        %s1240 = smul.addr %s1239, 8
        %s1241 = scalar_lea.vmem [#allocation20], %s1240
        // Predicated region
        $region97: #{tpu_custom_call.1} parent=55 // pred_check
          %p1242 = pneg %p256
        $region98: #{tpu_custom_call.1} parent=55 // pred_check_branch
          %1244 = sbr.rel (%p1242) target = $region100
        $region99: #{tpu_custom_call.1} parent=55 // pred_region
          %s1246 = ssub.s32 128, 128
          %1247 = vsyncadd %s1238, %s1246
          %s1248 = sadd.s32 %s35, %s34
          %s1249 = smul.addr %s1248, 128
          %s1250 = scalar_lea.hbm %s9, %s1249
          %s1252 = sshll.u32 %s1241, 4
          %s1253 = int_to_ptr.vmem [resolvable:$true] %s1252
          %1255 = dma.vmem_to_hbm [thread:$0]  %s1253, 128, %s1250, %s1238
        $region100: #{tpu_custom_call.1} parent=55 // pred_fallthru
          _
      $region56: #{tpu_custom_call.1} parent=5 // pred_fallthru
        _
      %p1256 = scmp.le.s32.totalorder 2, %s25
      // Predicated region
      $region101: #{tpu_custom_call.1} parent=5 // pred_check
        %p1257 = pneg %p1256
      $region102: #{tpu_custom_call.1} parent=5 // pred_check_branch
        %1259 = sbr.rel (%p1257) target = $region104
      $region103: #{tpu_custom_call.1} parent=5 // pred_region
        %s1260 = ssub.s32 %s25, 2
        // Predicated region
        $region105: #{tpu_custom_call.1} parent=103 // pred_check
          %p1261 = pneg %p262
        $region106: #{tpu_custom_call.1} parent=103 // pred_check_branch
          %1263 = sbr.rel (%p1261) target = $region108
        $region107: #{tpu_custom_call.1} parent=103 // pred_region
          %s1264 = sand.u32 %s247, 1
          %s1265 = scalar_lea.sflag [#allocation7], %s1264
          %s1266 = sand.u32 %s247, 1
          %s1267 = smul.addr %s1266, 8
          %s1268 = scalar_lea.vmem [#allocation20], %s1267
          %1269 = dma.done %s1265, 128
        $region108: #{tpu_custom_call.1} parent=103 // pred_fallthru
          _
      $region104: #{tpu_custom_call.1} parent=5 // pred_fallthru
        _
    $region6: #{tpu_custom_call.1} parent=1 // loop_footer
      %s29 = sadd.s32 1, %s25
    $region7: #{tpu_custom_call.1} parent=1 // loop_footer_branch
      %24 = sbr.rel target = $region3
    $region8: #{tpu_custom_call.1} parent=1 // loop_exit
      _
    %1270 = vsyncpa [#allocation6], 1
    %s1271 = scalar_lea.sflag [#allocation6], 1
    %1272 = vsyncpa %s1271, 1
    %1273 = vsyncpa [#allocation9], 1
    %1274 = vsyncpa [#allocation12], 1
    %1275 = vsyncpa [#allocation15], 1
    %1276 = vsyncpa [#allocation18], 1
    %1277 = vsyncpa [#allocation7], 1
    %s1278 = scalar_lea.sflag [#allocation7], 1
    %1279 = vsyncpa %s1278, 1

</llo_original>
